<compile_context>
chip_gen: v5e
topology: v5e:2x2
jax: 0.10.0
libtpu: 0.0.40
codegen_flags: <defaults>
</compile_context>

<pallas_src>
import functools

import jax
import jax.numpy as jnp
import numpy as np
from jax.experimental import pallas as pl
from jax.experimental.pallas import tpu as pltpu

EPS = 1e-5  # torch.nn.LayerNorm default


def _layernorm(v, g, b):
    mu = jnp.mean(v, axis=-1, keepdims=True)
    var = jnp.mean(jnp.square(v - mu), axis=-1, keepdims=True)
    return (v - mu) * jax.lax.rsqrt(var + EPS) * g + b


def _bf16_dot(a, b):
    # MXU-native single-pass matmul: bf16 operands, f32 accumulation.
    return jnp.dot(a.astype(jnp.bfloat16), b.astype(jnp.bfloat16),
                   preferred_element_type=jnp.float32)


# --------------------------- fused kernel -----------------------------------

def encoder_kernel(eot_ref,                       # scalar prefetch (SMEM): (N,) int32
                   prompts_ref, pos_ref,          # (Bblk,L,D) f32, (L,D) f32
                   ln1g, ln1b, wqkv, bqkv, wo, bo,
                   ln2g, ln2b, wfc, bfc, wpr, bpr,
                   lnfg, lnfb, proj_ref,
                   out_ref,                       # (Bblk, Dout) f32
                   x_scratch,                     # VMEM (Bblk, L, D) f32 residual
                   attn_scratch,                  # VMEM (Bblk, L, D) bf16 head slab
                   xm_scratch,                    # VMEM (Bblk, D) f32 EOT rows
                   *, n_heads, n_layers, b_blk, bf16_act):
    l = pl.program_id(1)
    # Hoisted OUT of pl.when bodies (program_id inside a cond branch does not lower).
    b_base = pl.program_id(0) * b_blk

    # ---- layer 0: fuse "prompts + positional_embedding" into the first step.
    @pl.when(l == 0)
    def _init():
        x_scratch[...] = prompts_ref[...] + pos_ref[...]

    x = x_scratch[...]                            # (B, L, D) f32
    B, L, D = x.shape
    dh = D // n_heads
    scale = 1.0 / float(np.sqrt(dh))

    # ---------------- multi-head causal self-attention (pre-LN) -------------
    h = _layernorm(x, ln1g[0, 0], ln1b[0, 0])                     # (B,L,D) f32
    qkv = _bf16_dot(h.reshape(B * L, D), wqkv[0]) + bqkv[0]       # (B*L, 3D) f32
    qkv = qkv.reshape(B, L, 3 * D)                                # free view (L % 8 == 0)
    # single bf16 cast for all heads; fold 1/sqrt(dh) into q
    qb = (qkv[:, :, 0:D] * scale).astype(jnp.bfloat16)
    kb = qkv[:, :, D:2 * D].astype(jnp.bfloat16)
    vb = qkv[:, :, 2 * D:3 * D].astype(jnp.bfloat16)

    # causal mask built in-kernel (also neutralizes padded key positions)
    q_ids = jax.lax.broadcasted_iota(jnp.int32, (L, L), 0)
    k_ids = jax.lax.broadcasted_iota(jnp.int32, (L, L), 1)
    causal = (k_ids <= q_ids)[None]               # (1,L,L)

    # small static loop over heads; each head's temporaries sink into the
    # bf16 scratch slab, so liveness stays per-head.
    for hd in range(n_heads):
        sl = slice(hd * dh, (hd + 1) * dh)
        s = jnp.einsum('bqd,bkd->bqk', qb[:, :, sl], kb[:, :, sl],
                       preferred_element_type=jnp.float32)        # (B,L,L) f32
        s = jnp.where(causal, s, jnp.float32(-1e30))
        s = s - jnp.max(s, axis=-1, keepdims=True)
        p = jnp.exp(s)
        p = p * pl.reciprocal(jnp.sum(p, axis=-1, keepdims=True), approx=True)
        oh = jnp.einsum('bqk,bkd->bqd', p.astype(jnp.bfloat16), vb[:, :, sl],
                        preferred_element_type=jnp.float32)       # (B,L,dh)
        attn_scratch[:, :, sl] = oh.astype(jnp.bfloat16)

    # single full-depth (K = D) out-projection over the assembled head slab
    o = jnp.dot(attn_scratch[...].reshape(B * L, D), wo[0],
                preferred_element_type=jnp.float32) + bo[0]
    x = x + o.reshape(B, L, D)

    # ---------------- MLP with QuickGELU (CLIP) ------------------------------
    h2 = _layernorm(x, ln2g[0, 0], ln2b[0, 0]).reshape(B * L, D)
    h2 = _bf16_dot(h2, wfc[0]) + bfc[0]                           # (B*L, 4D) f32
    if bf16_act:
        # v6e / v7x: bf16 EUP -> halve transcendental cost, feed matmul directly
        h2 = h2.astype(jnp.bfloat16)
        act = h2 * jax.nn.sigmoid(1.702 * h2)
    else:
        # v5e: no bf16 VPU/EUP path -> keep activation math in f32
        act = (h2 * jax.nn.sigmoid(1.702 * h2)).astype(jnp.bfloat16)
    h2o = jnp.dot(act, wpr[0], preferred_element_type=jnp.float32) + bpr[0]
    x = x + h2o.reshape(B, L, D)

    x_scratch[...] = x

    # ---- last layer: ln_final + EOT-token gather + text_projection ----------
    @pl.when(l == n_layers - 1)
    def _final():
        for bi in range(b_blk):                   # static small loop
            idx = eot_ref[b_base + bi]            # dynamic scalar from SMEM
            xm_scratch[pl.ds(bi, 1), :] = x_scratch[bi, pl.ds(idx, 1), :]
        xm = _layernorm(xm_scratch[...], lnfg[0], lnfb[0])
        out_ref[...] = _bf16_dot(xm, proj_ref[...]).astype(out_ref.dtype)


# --------------------------- wrapper -----------------------------------------

def _device_caps():
    """TPU-generation-dependent tiling / VMEM defaults (conservative if unknown)."""
    try:
        kind = jax.devices()[0].device_kind.lower()
    except Exception:
        kind = ""
    is_v5e = ("v5 lite" in kind) or ("v5e" in kind) or ("v5litepod" in kind)
    is_v6 = "v6" in kind
    is_v7 = "v7" in kind
    if is_v5e or is_v6:
        # 128 MiB VMEM parts: big batch blocks + high scoped-VMEM limit so the
        # per-layer weight DMA is amortized over more tokens and stays hidden.
        return dict(b_cap=16, vmem=100 * 1024 * 1024, bf16_act=is_v6, two_tc=False)
    if is_v7:
        # 64 MiB VMEM, 2 TensorCores: keep blocks small, keep >=2 batch blocks.
        return dict(b_cap=8, vmem=48 * 1024 * 1024, bf16_act=True, two_tc=True)
    # unknown (CPU interpret, v4/v5p, ...): safe everywhere
    return dict(b_cap=8, vmem=48 * 1024 * 1024, bf16_act=True, two_tc=False)


def _pick_b_blk(n, cap, two_tc):
    b = max(1, min(n, cap))
    while n % b:                 # always a divisor of n (no batch-padding needed)
        b -= 1
    if two_tc and n // b < 2 and n % 2 == 0:
        b = n // 2               # make the parallel batch axis span both TCs
    return max(b, 1)


def text_encoder_forward(prompts, tokenized_prompts, params, n_heads,
                         b_blk=None, vmem_limit_bytes=None, bf16_act=None):
    N, L, D = prompts.shape
    n_layers = params["w_qkv_t"].shape[0]
    Dout = params["text_projection"].shape[1]

    caps = _device_caps()
    if b_blk is None:
        b_blk = _pick_b_blk(N, caps["b_cap"], caps["two_tc"])
    if vmem_limit_bytes is None:
        vmem_limit_bytes = caps["vmem"]
    if bf16_act is None:
        bf16_act = caps["bf16_act"]
    assert N % b_blk == 0

    # EOT position (argmax over token ids): scalar glue in plain JAX -> SMEM prefetch.
    eot = jnp.argmax(tokenized_prompts, axis=-1).astype(jnp.int32)

    # Pad seq length to a multiple of 8 (e.g. 77 -> 80 for real CLIP) so the
    # in-kernel (B,L,D)<->(B*L,D) reshapes are free views.  Padded keys sit
    # after all real positions so the causal mask excludes them; EOT < L.
    L_pad = -(-L // 8) * 8
    pos = params["pos_emb"]
    if L_pad != L:
        prompts = jnp.pad(prompts, ((0, 0), (0, L_pad - L), (0, 0)))
        pos = jnp.pad(pos, ((0, L_pad - L), (0, 0)))

    def lay(block):       # per-layer stacked weight, indexed by the layer grid id
        return pl.BlockSpec(block, lambda b, l, eot: (l, 0, 0))

    def const2(block):    # grid-invariant 2-D input
        return pl.BlockSpec(block, lambda b, l, eot: (0, 0))

    in_specs = [
        pl.BlockSpec((b_blk, L_pad, D), lambda b, l, eot: (b, 0, 0)),   # prompts
        const2((L_pad, D)),                                             # pos_emb
        lay((1, 1, D)), lay((1, 1, D)),                                 # ln1 g,b
        lay((1, D, 3 * D)), lay((1, 1, 3 * D)),                         # w_qkv_t, b_qkv
        lay((1, D, D)), lay((1, 1, D)),                                 # w_o_t, b_o
        lay((1, 1, D)), lay((1, 1, D)),                                 # ln2 g,b
        lay((1, D, 4 * D)), lay((1, 1, 4 * D)),                         # w_fc_t, b_fc
        lay((1, 4 * D, D)), lay((1, 1, D)),                             # w_pr_t, b_pr
        const2((1, D)), const2((1, D)),                                 # lnf g,b
        const2((D, Dout)),                                              # text_projection
    ]

    gs = pltpu.PrefetchScalarGridSpec(
        num_scalar_prefetch=1,
        grid=(N // b_blk, n_layers),
        in_specs=in_specs,
        out_specs=pl.BlockSpec((b_blk, Dout), lambda b, l, eot: (b, 0)),
        scratch_shapes=[
            pltpu.VMEM((b_blk, L_pad, D), jnp.float32),    # resident residual stream
            pltpu.VMEM((b_blk, L_pad, D), jnp.bfloat16),   # per-head attention slab
            pltpu.VMEM((b_blk, D), jnp.float32),           # EOT-gathered rows
        ])

    return pl.pallas_call(
        functools.partial(encoder_kernel, n_heads=n_heads, n_layers=n_layers,
                          b_blk=b_blk, bf16_act=bf16_act),
        out_shape=jax.ShapeDtypeStruct((N, Dout), jnp.float32),
        grid_spec=gs,
        compiler_params=pltpu.CompilerParams(
            dimension_semantics=("parallel", "arbitrary"),
            vmem_limit_bytes=vmem_limit_bytes),
    )(eot, prompts, pos,
      params["ln1_g"], params["ln1_b"], params["w_qkv_t"], params["b_qkv"],
      params["w_o_t"], params["b_o"], params["ln2_g"], params["ln2_b"],
      params["w_fc_t"], params["b_fc"], params["w_pr_t"], params["b_pr"],
      params["lnf_g"], params["lnf_b"], params["text_projection"])


# --------------------------- params & reference ------------------------------
# Layout mapping from PyTorch CLIP:
#   w_qkv_t = in_proj_weight.T (D,3D)   b_qkv = in_proj_bias
#   w_o_t   = out_proj.weight.T (D,D)   b_o   = out_proj.bias
#   w_fc_t  = mlp.c_fc.weight.T (D,4D)  w_pr_t = mlp.c_proj.weight.T (4D,D)
# Matmul weights are stored bf16 (halved HBM/VMEM traffic); LN params/biases f32.

def init_params(key, *, n_layers, L, D, Dout):
    keys = iter(jax.random.split(key, 8 * n_layers + 8))

    def rnd(shape, s=0.02, dtype=jnp.bfloat16):
        return (s * jax.random.normal(next(keys), shape)).astype(dtype)

    return dict(
        pos_emb=rnd((L, D), 0.01, jnp.float32),
        ln1_g=jnp.ones((n_layers, 1, D), jnp.float32),
        ln1_b=jnp.zeros((n_layers, 1, D), jnp.float32),
        w_qkv_t=rnd((n_layers, D, 3 * D)),
        b_qkv=rnd((n_layers, 1, 3 * D), dtype=jnp.float32),
        w_o_t=rnd((n_layers, D, D)),
        b_o=rnd((n_layers, 1, D), dtype=jnp.float32),
        ln2_g=jnp.ones((n_layers, 1, D), jnp.float32),
        ln2_b=jnp.zeros((n_layers, 1, D), jnp.float32),
        w_fc_t=rnd((n_layers, D, 4 * D)),
        b_fc=rnd((n_layers, 1, 4 * D), dtype=jnp.float32),
        w_pr_t=rnd((n_layers, 4 * D, D)),
        b_pr=rnd((n_layers, 1, D), dtype=jnp.float32),
        lnf_g=jnp.ones((1, D), jnp.float32),
        lnf_b=jnp.zeros((1, D), jnp.float32),
        text_projection=rnd((D, Dout)),
    )


def reference_forward(prompts, tokenized, params, n_heads):
    """Pure-JAX f32/HIGHEST reference (same stored weight values)."""
    f32 = lambda a: jnp.asarray(a, jnp.float32)
    hp = jax.lax.Precision.HIGHEST
    x = prompts + params["pos_emb"][None]
    N, L, D = x.shape
    dh = D // n_heads
    mask = jnp.triu(jnp.full((L, L), -jnp.inf, jnp.float32), k=1)
    n_layers = params["w_qkv_t"].shape[0]
    for li in range(n_layers):
        h = _layernorm(x, params["ln1_g"][li, 0], params["ln1_b"][li, 0])
        qkv = jnp.einsum("nld,de->nle", h, f32(params["w_qkv_t"][li]),
                         precision=hp) + params["b_qkv"][li, 0]
        q, k, v = jnp.split(qkv, 3, axis=-1)
        q = q.reshape(N, L, n_heads, dh)
        k = k.reshape(N, L, n_heads, dh)
        v = v.reshape(N, L, n_heads, dh)
        s = jnp.einsum("nqhd,nkhd->nhqk", q, k, precision=hp) / np.sqrt(dh) + mask
        a = jax.nn.softmax(s, axis=-1)
        o = jnp.einsum("nhqk,nkhd->nqhd", a, v, precision=hp).reshape(N, L, D)
        o = jnp.einsum("nld,de->nle", o, f32(params["w_o_t"][li]),
                       precision=hp) + params["b_o"][li, 0]
        x = x + o
        h2 = _layernorm(x, params["ln2_g"][li, 0], params["ln2_b"][li, 0])
        h2 = jnp.einsum("nld,de->nle", h2, f32(params["w_fc_t"][li]),
                        precision=hp) + params["b_fc"][li, 0]
        h2 = h2 * jax.nn.sigmoid(1.702 * h2)
        h2 = jnp.einsum("nle,ed->nld", h2, f32(params["w_pr_t"][li]),
                        precision=hp) + params["b_pr"][li, 0]
        x = x + h2
    x = _layernorm(x, params["lnf_g"][0], params["lnf_b"][0])
    eot = jnp.argmax(tokenized, axis=-1)
    sel = x[jnp.arange(N), eot]
    return jnp.einsum("nd,de->ne", sel, f32(params["text_projection"]), precision=hp)


# --------------------------- main --------------------------------------------

if __name__ == "__main__":
    N, L, D, H, NLAYERS, DOUT = 2, 8, 32, 4, 2, 32

    key = jax.random.PRNGKey(0)
    kp, kt, kw = jax.random.split(key, 3)
    params = init_params(kw, n_layers=NLAYERS, L=L, D=D, Dout=DOUT)

    prompts = (0.02 * jax.random.normal(kp, (N, L, D))).astype(jnp.float32)
    tokenized_prompts = jax.random.randint(kt, (N, L), 1, 1000).astype(jnp.int32)

    out = text_encoder_forward(prompts, tokenized_prompts, params, H)
    out = jax.block_until_ready(out)

    ref = reference_forward(prompts, tokenized_prompts, params, H)
    # kernel uses bf16 MXU matmuls, bf16 QuickGELU (on bf16-EUP chips) and an
    # approx reciprocal in softmax; the reference is f32/HIGHEST.
    np.testing.assert_allclose(np.asarray(out), np.asarray(ref),
                               atol=2e-2, rtol=2e-2)
    print("KERNEL_OK")
</pallas_src>

<mosaic_0001>
module attributes {stable_mosaic.version = 11 : i64} {
  func.func @encoder_kernel(%arg0: i32, %arg1: i32, %arg2: memref<2xi32, #tpu.memory_space<smem>>, %arg3: memref<2x8x32xf32, #tpu.memory_space<vmem>>, %arg4: memref<8x32xf32, #tpu.memory_space<vmem>>, %arg5: memref<1x1x32xf32, #tpu.memory_space<vmem>>, %arg6: memref<1x1x32xf32, #tpu.memory_space<vmem>>, %arg7: memref<1x32x96xbf16, #tpu.memory_space<vmem>>, %arg8: memref<1x1x96xf32, #tpu.memory_space<vmem>>, %arg9: memref<1x32x32xbf16, #tpu.memory_space<vmem>>, %arg10: memref<1x1x32xf32, #tpu.memory_space<vmem>>, %arg11: memref<1x1x32xf32, #tpu.memory_space<vmem>>, %arg12: memref<1x1x32xf32, #tpu.memory_space<vmem>>, %arg13: memref<1x32x128xbf16, #tpu.memory_space<vmem>>, %arg14: memref<1x1x128xf32, #tpu.memory_space<vmem>>, %arg15: memref<1x128x32xbf16, #tpu.memory_space<vmem>>, %arg16: memref<1x1x32xf32, #tpu.memory_space<vmem>>, %arg17: memref<1x32xf32, #tpu.memory_space<vmem>>, %arg18: memref<1x32xf32, #tpu.memory_space<vmem>>, %arg19: memref<32x32xbf16, #tpu.memory_space<vmem>>, %arg20: memref<2x32xf32, #tpu.memory_space<vmem>>, %arg21: memref<2x8x32xf32, #tpu.memory_space<vmem>>, %arg22: memref<2x8x32xbf16, #tpu.memory_space<vmem>>, %arg23: memref<2x32xf32, #tpu.memory_space<vmem>>) attributes {dimension_semantics = [#tpu.dimension_semantics<parallel>, #tpu.dimension_semantics<arbitrary>], iteration_bounds = array<i64: 1, 2>, scalar_prefetch = 1 : i64, scratch_operands = 3 : i64, tpu.core_type = #tpu.core_type<tc>, window_params = [{transform_indices = @transform_0, window_bounds = array<i64: 2, 8, 32>}, {pipeline_mode = #tpu.pipeline_mode<synchronous>, transform_indices = @transform_1, window_bounds = array<i64: 8, 32>}, {transform_indices = @transform_2, window_bounds = array<i64: 1, 1, 32>}, {transform_indices = @transform_3, window_bounds = array<i64: 1, 1, 32>}, {transform_indices = @transform_4, window_bounds = array<i64: 1, 32, 96>}, {transform_indices = @transform_5, window_bounds = array<i64: 1, 1, 96>}, {transform_indices = @transform_6, window_bounds = array<i64: 1, 32, 32>}, {transform_indices = @transform_7, window_bounds = array<i64: 1, 1, 32>}, {transform_indices = @transform_8, window_bounds = array<i64: 1, 1, 32>}, {transform_indices = @transform_9, window_bounds = array<i64: 1, 1, 32>}, {transform_indices = @transform_10, window_bounds = array<i64: 1, 32, 128>}, {transform_indices = @transform_11, window_bounds = array<i64: 1, 1, 128>}, {transform_indices = @transform_12, window_bounds = array<i64: 1, 128, 32>}, {transform_indices = @transform_13, window_bounds = array<i64: 1, 1, 32>}, {pipeline_mode = #tpu.pipeline_mode<synchronous>, transform_indices = @transform_14, window_bounds = array<i64: 1, 32>}, {pipeline_mode = #tpu.pipeline_mode<synchronous>, transform_indices = @transform_15, window_bounds = array<i64: 1, 32>}, {pipeline_mode = #tpu.pipeline_mode<synchronous>, transform_indices = @transform_16, window_bounds = array<i64: 32, 32>}, {transform_indices = @transform_17, window_bounds = array<i64: 2, 32>}]} {
    %c2_i32 = arith.constant 2 : i32
    %0 = arith.muli %arg0, %c2_i32 : i32
    %c0_i32 = arith.constant 0 : i32
    %1 = arith.cmpi eq, %arg1, %c0_i32 : i32
    %2 = arith.extui %1 : i1 to i32
    %c0_i32_0 = arith.constant 0 : i32
    %3 = arith.cmpi ne, %2, %c0_i32_0 : i32
    scf.if %3 {
      %c0_91 = arith.constant 0 : index
      %c0_92 = arith.constant 0 : index
      %c0_93 = arith.constant 0 : index
      %213 = vector.load %arg3[%c0_91, %c0_92, %c0_93] : memref<2x8x32xf32, #tpu.memory_space<vmem>>, vector<2x8x32xf32>
      %c0_94 = arith.constant 0 : index
      %c0_95 = arith.constant 0 : index
      %214 = vector.load %arg4[%c0_94, %c0_95] : memref<8x32xf32, #tpu.memory_space<vmem>>, vector<8x32xf32>
      %215 = vector.shape_cast %214 : vector<8x32xf32> to vector<1x8x32xf32>
      %216 = vector.broadcast %215 : vector<1x8x32xf32> to vector<2x8x32xf32>
      %217 = arith.addf %213, %216 : vector<2x8x32xf32>
      %c0_96 = arith.constant 0 : index
      %c0_97 = arith.constant 0 : index
      %c0_98 = arith.constant 0 : index
      %218 = vector.load %arg21[%c0_96, %c0_97, %c0_98] : memref<2x8x32xf32, #tpu.memory_space<vmem>>, vector<2x8x32xf32>
      tpu.vector_store %arg21[%c0_96, %c0_97, %c0_98], %217 {strides = array<i32>} : memref<2x8x32xf32, #tpu.memory_space<vmem>>, vector<2x8x32xf32>,
    } else {
    }
    %c0 = arith.constant 0 : index
    %c0_1 = arith.constant 0 : index
    %c0_2 = arith.constant 0 : index
    %4 = vector.load %arg21[%c0, %c0_1, %c0_2] : memref<2x8x32xf32, #tpu.memory_space<vmem>>, vector<2x8x32xf32>
    %c0_3 = arith.constant 0 : index
    %c0_4 = arith.constant 0 : index
    %c0_5 = arith.constant 0 : index
    %5 = vector.load %arg5[%c0_3, %c0_4, %c0_5] : memref<1x1x32xf32, #tpu.memory_space<vmem>>, vector<1x1x32xf32>
    %6 = vector.shape_cast %5 : vector<1x1x32xf32> to vector<32xf32>
    %c0_6 = arith.constant 0 : index
    %c0_7 = arith.constant 0 : index
    %c0_8 = arith.constant 0 : index
    %7 = vector.load %arg6[%c0_6, %c0_7, %c0_8] : memref<1x1x32xf32, #tpu.memory_space<vmem>>, vector<1x1x32xf32>
    %8 = vector.shape_cast %7 : vector<1x1x32xf32> to vector<32xf32>
    %cst = arith.constant dense<0.000000e+00> : vector<2x8xf32>
    %9 = vector.multi_reduction <add>, %4, %cst [2] : vector<2x8x32xf32> to vector<2x8xf32>
    %10 = vector.shape_cast %9 : vector<2x8xf32> to vector<2x8x1xf32>
    %cst_9 = arith.constant 3.200000e+01 : f32
    %11 = vector.broadcast %cst_9 : f32 to vector<2x8x1xf32>
    %12 = arith.divf %10, %11 : vector<2x8x1xf32>
    %13 = vector.broadcast %12 : vector<2x8x1xf32> to vector<2x8x32xf32>
    %14 = arith.subf %4, %13 : vector<2x8x32xf32>
    %15 = arith.mulf %14, %14 : vector<2x8x32xf32>
    %cst_10 = arith.constant dense<0.000000e+00> : vector<2x8xf32>
    %16 = vector.multi_reduction <add>, %15, %cst_10 [2] : vector<2x8x32xf32> to vector<2x8xf32>
    %17 = vector.shape_cast %16 : vector<2x8xf32> to vector<2x8x1xf32>
    %cst_11 = arith.constant 3.200000e+01 : f32
    %18 = vector.broadcast %cst_11 : f32 to vector<2x8x1xf32>
    %19 = arith.divf %17, %18 : vector<2x8x1xf32>
    %20 = vector.broadcast %12 : vector<2x8x1xf32> to vector<2x8x32xf32>
    %21 = arith.subf %4, %20 : vector<2x8x32xf32>
    %cst_12 = arith.constant 9.99999974E-6 : f32
    %22 = vector.broadcast %cst_12 : f32 to vector<2x8x1xf32>
    %23 = arith.addf %19, %22 : vector<2x8x1xf32>
    %24 = math.rsqrt %23 : vector<2x8x1xf32>
    %25 = vector.broadcast %24 : vector<2x8x1xf32> to vector<2x8x32xf32>
    %26 = arith.mulf %21, %25 : vector<2x8x32xf32>
    %27 = vector.shape_cast %6 : vector<32xf32> to vector<1x1x32xf32>
    %28 = vector.broadcast %27 : vector<1x1x32xf32> to vector<2x8x32xf32>
    %29 = arith.mulf %26, %28 : vector<2x8x32xf32>
    %30 = vector.shape_cast %8 : vector<32xf32> to vector<1x1x32xf32>
    %31 = vector.broadcast %30 : vector<1x1x32xf32> to vector<2x8x32xf32>
    %32 = arith.addf %29, %31 : vector<2x8x32xf32>
    %33 = vector.shape_cast %32 : vector<2x8x32xf32> to vector<16x32xf32>
    %c0_13 = arith.constant 0 : index
    %c0_14 = arith.constant 0 : index
    %c0_15 = arith.constant 0 : index
    %34 = vector.load %arg7[%c0_13, %c0_14, %c0_15] : memref<1x32x96xbf16, #tpu.memory_space<vmem>>, vector<1x32x96xbf16>
    %35 = vector.shape_cast %34 : vector<1x32x96xbf16> to vector<32x96xbf16>
    %36 = arith.truncf %33 : vector<16x32xf32> to vector<16x32xbf16>
    %cst_16 = arith.constant dense<0.000000e+00> : vector<16x96xf32>
    %37 = tpu.matmul %36, %35, %cst_16 {dimension_numbers = #tpu.dot_dimension_numbers<[1], [0], [0], [1], [0, 0, 1, 1], [], []>} : vector<16x32xbf16>, vector<32x96xbf16>, vector<16x96xf32> -> vector<16x96xf32>
    %c0_17 = arith.constant 0 : index
    %c0_18 = arith.constant 0 : index
    %c0_19 = arith.constant 0 : index
    %38 = vector.load %arg8[%c0_17, %c0_18, %c0_19] : memref<1x1x96xf32, #tpu.memory_space<vmem>>, vector<1x1x96xf32>
    %39 = vector.shape_cast %38 : vector<1x1x96xf32> to vector<1x96xf32>
    %40 = vector.broadcast %39 : vector<1x96xf32> to vector<16x96xf32>
    %41 = arith.addf %37, %40 : vector<16x96xf32>
    %42 = vector.shape_cast %41 : vector<16x96xf32> to vector<2x8x96xf32>
    %43 = vector.extract_strided_slice %42 {offsets = [0, 0, 0], sizes = [2, 8, 32], strides = [1, 1, 1]} : vector<2x8x96xf32> to vector<2x8x32xf32>
    %cst_20 = arith.constant 0.353553385 : f32
    %44 = vector.broadcast %cst_20 : f32 to vector<2x8x32xf32>
    %45 = arith.mulf %43, %44 : vector<2x8x32xf32>
    %46 = arith.truncf %45 : vector<2x8x32xf32> to vector<2x8x32xbf16>
    %47 = vector.extract_strided_slice %42 {offsets = [0, 0, 32], sizes = [2, 8, 32], strides = [1, 1, 1]} : vector<2x8x96xf32> to vector<2x8x32xf32>
    %48 = arith.truncf %47 : vector<2x8x32xf32> to vector<2x8x32xbf16>
    %49 = vector.extract_strided_slice %42 {offsets = [0, 0, 64], sizes = [2, 8, 32], strides = [1, 1, 1]} : vector<2x8x96xf32> to vector<2x8x32xf32>
    %50 = arith.truncf %49 : vector<2x8x32xf32> to vector<2x8x32xbf16>
    %51 = tpu.iota {dimensions = array<i32: 0>} : vector<8x8xi32>
    %52 = tpu.iota {dimensions = array<i32: 1>} : vector<8x8xi32>
    %53 = arith.cmpi sle, %52, %51 : vector<8x8xi32>
    %54 = vector.shape_cast %53 : vector<8x8xi1> to vector<1x8x8xi1>
    %55 = vector.extract_strided_slice %46 {offsets = [0, 0, 0], sizes = [2, 8, 8], strides = [1, 1, 1]} : vector<2x8x32xbf16> to vector<2x8x8xbf16>
    %56 = vector.extract_strided_slice %48 {offsets = [0, 0, 0], sizes = [2, 8, 8], strides = [1, 1, 1]} : vector<2x8x32xbf16> to vector<2x8x8xbf16>
    "tpu.trace_start"() <{level = 10 : i32, message = "bqd,bkd->bqk"}> : () -> ()
    %cst_21 = arith.constant dense<0.000000e+00> : vector<2x8x8xf32>
    %57 = tpu.matmul %55, %56, %cst_21 {dimension_numbers = #tpu.dot_dimension_numbers<[2], [2], [1], [1], [0, 0, 0, 1, 1, 1], [0], [0]>} : vector<2x8x8xbf16>, vector<2x8x8xbf16>, vector<2x8x8xf32> -> vector<2x8x8xf32>
    %cst_22 = arith.constant -1.000000e+30 : f32
    "tpu.trace_stop"() : () -> ()
    %58 = vector.shape_cast %54 : vector<1x8x8xi1> to vector<1x8x8xi1>
    %59 = vector.broadcast %58 : vector<1x8x8xi1> to vector<2x8x8xi1>
    %60 = vector.broadcast %cst_22 : f32 to vector<2x8x8xf32>
    %61 = arith.select %59, %57, %60 : vector<2x8x8xi1>, vector<2x8x8xf32>
    %cst_23 = arith.constant dense<0xFF800000> : vector<2x8xf32>
    %62 = vector.multi_reduction <maximumf>, %61, %cst_23 [2] : vector<2x8x8xf32> to vector<2x8xf32>
    %63 = vector.shape_cast %62 : vector<2x8xf32> to vector<2x8x1xf32>
    %64 = vector.broadcast %63 : vector<2x8x1xf32> to vector<2x8x8xf32>
    %65 = arith.subf %61, %64 : vector<2x8x8xf32>
    %66 = math.exp %65 : vector<2x8x8xf32>
    %cst_24 = arith.constant dense<0.000000e+00> : vector<2x8xf32>
    %67 = vector.multi_reduction <add>, %66, %cst_24 [2] : vector<2x8x8xf32> to vector<2x8xf32>
    %68 = vector.shape_cast %67 : vector<2x8xf32> to vector<2x8x1xf32>
    %69 = tpu.reciprocal %68 {approx = true} : vector<2x8x1xf32> -> vector<2x8x1xf32>
    %70 = vector.broadcast %69 : vector<2x8x1xf32> to vector<2x8x8xf32>
    %71 = arith.mulf %66, %70 : vector<2x8x8xf32>
    %72 = arith.truncf %71 : vector<2x8x8xf32> to vector<2x8x8xbf16>
    %73 = vector.extract_strided_slice %50 {offsets = [0, 0, 0], sizes = [2, 8, 8], strides = [1, 1, 1]} : vector<2x8x32xbf16> to vector<2x8x8xbf16>
    "tpu.trace_start"() <{level = 10 : i32, message = "bqk,bkd->bqd"}> : () -> ()
    %cst_25 = arith.constant dense<0.000000e+00> : vector<2x8x8xf32>
    %74 = tpu.matmul %72, %73, %cst_25 {dimension_numbers = #tpu.dot_dimension_numbers<[2], [1], [1], [2], [0, 0, 0, 1, 1, 2], [0], [0]>} : vector<2x8x8xbf16>, vector<2x8x8xbf16>, vector<2x8x8xf32> -> vector<2x8x8xf32>
    "tpu.trace_stop"() : () -> ()
    %75 = arith.truncf %74 : vector<2x8x8xf32> to vector<2x8x8xbf16>
    %c0_26 = arith.constant 0 : index
    %c0_27 = arith.constant 0 : index
    %c0_28 = arith.constant 0 : index
    %76 = vector.load %arg22[%c0_26, %c0_27, %c0_28] : memref<2x8x32xbf16, #tpu.memory_space<vmem>>, vector<2x8x8xbf16>
    tpu.vector_store %arg22[%c0_26, %c0_27, %c0_28], %75 {strides = array<i32>} : memref<2x8x32xbf16, #tpu.memory_space<vmem>>, vector<2x8x8xbf16>,
    %77 = vector.extract_strided_slice %46 {offsets = [0, 0, 8], sizes = [2, 8, 8], strides = [1, 1, 1]} : vector<2x8x32xbf16> to vector<2x8x8xbf16>
    %78 = vector.extract_strided_slice %48 {offsets = [0, 0, 8], sizes = [2, 8, 8], strides = [1, 1, 1]} : vector<2x8x32xbf16> to vector<2x8x8xbf16>
    "tpu.trace_start"() <{level = 10 : i32, message = "bqd,bkd->bqk"}> : () -> ()
    %cst_29 = arith.constant dense<0.000000e+00> : vector<2x8x8xf32>
    %79 = tpu.matmul %77, %78, %cst_29 {dimension_numbers = #tpu.dot_dimension_numbers<[2], [2], [1], [1], [0, 0, 0, 1, 1, 1], [0], [0]>} : vector<2x8x8xbf16>, vector<2x8x8xbf16>, vector<2x8x8xf32> -> vector<2x8x8xf32>
    %cst_30 = arith.constant -1.000000e+30 : f32
    "tpu.trace_stop"() : () -> ()
    %80 = vector.shape_cast %54 : vector<1x8x8xi1> to vector<1x8x8xi1>
    %81 = vector.broadcast %80 : vector<1x8x8xi1> to vector<2x8x8xi1>
    %82 = vector.broadcast %cst_30 : f32 to vector<2x8x8xf32>
    %83 = arith.select %81, %79, %82 : vector<2x8x8xi1>, vector<2x8x8xf32>
    %cst_31 = arith.constant dense<0xFF800000> : vector<2x8xf32>
    %84 = vector.multi_reduction <maximumf>, %83, %cst_31 [2] : vector<2x8x8xf32> to vector<2x8xf32>
    %85 = vector.shape_cast %84 : vector<2x8xf32> to vector<2x8x1xf32>
    %86 = vector.broadcast %85 : vector<2x8x1xf32> to vector<2x8x8xf32>
    %87 = arith.subf %83, %86 : vector<2x8x8xf32>
    %88 = math.exp %87 : vector<2x8x8xf32>
    %cst_32 = arith.constant dense<0.000000e+00> : vector<2x8xf32>
    %89 = vector.multi_reduction <add>, %88, %cst_32 [2] : vector<2x8x8xf32> to vector<2x8xf32>
    %90 = vector.shape_cast %89 : vector<2x8xf32> to vector<2x8x1xf32>
    %91 = tpu.reciprocal %90 {approx = true} : vector<2x8x1xf32> -> vector<2x8x1xf32>
    %92 = vector.broadcast %91 : vector<2x8x1xf32> to vector<2x8x8xf32>
    %93 = arith.mulf %88, %92 : vector<2x8x8xf32>
    %94 = arith.truncf %93 : vector<2x8x8xf32> to vector<2x8x8xbf16>
    %95 = vector.extract_strided_slice %50 {offsets = [0, 0, 8], sizes = [2, 8, 8], strides = [1, 1, 1]} : vector<2x8x32xbf16> to vector<2x8x8xbf16>
    "tpu.trace_start"() <{level = 10 : i32, message = "bqk,bkd->bqd"}> : () -> ()
    %cst_33 = arith.constant dense<0.000000e+00> : vector<2x8x8xf32>
    %96 = tpu.matmul %94, %95, %cst_33 {dimension_numbers = #tpu.dot_dimension_numbers<[2], [1], [1], [2], [0, 0, 0, 1, 1, 2], [0], [0]>} : vector<2x8x8xbf16>, vector<2x8x8xbf16>, vector<2x8x8xf32> -> vector<2x8x8xf32>
    "tpu.trace_stop"() : () -> ()
    %97 = arith.truncf %96 : vector<2x8x8xf32> to vector<2x8x8xbf16>
    %c0_34 = arith.constant 0 : index
    %c0_35 = arith.constant 0 : index
    %c8 = arith.constant 8 : index
    %98 = vector.load %arg22[%c0_34, %c0_35, %c8] : memref<2x8x32xbf16, #tpu.memory_space<vmem>>, vector<2x8x8xbf16>
    tpu.vector_store %arg22[%c0_34, %c0_35, %c8], %97 {strides = array<i32>} : memref<2x8x32xbf16, #tpu.memory_space<vmem>>, vector<2x8x8xbf16>,
    %99 = vector.extract_strided_slice %46 {offsets = [0, 0, 16], sizes = [2, 8, 8], strides = [1, 1, 1]} : vector<2x8x32xbf16> to vector<2x8x8xbf16>
    %100 = vector.extract_strided_slice %48 {offsets = [0, 0, 16], sizes = [2, 8, 8], strides = [1, 1, 1]} : vector<2x8x32xbf16> to vector<2x8x8xbf16>
    "tpu.trace_start"() <{level = 10 : i32, message = "bqd,bkd->bqk"}> : () -> ()
    %cst_36 = arith.constant dense<0.000000e+00> : vector<2x8x8xf32>
    %101 = tpu.matmul %99, %100, %cst_36 {dimension_numbers = #tpu.dot_dimension_numbers<[2], [2], [1], [1], [0, 0, 0, 1, 1, 1], [0], [0]>} : vector<2x8x8xbf16>, vector<2x8x8xbf16>, vector<2x8x8xf32> -> vector<2x8x8xf32>
    %cst_37 = arith.constant -1.000000e+30 : f32
    "tpu.trace_stop"() : () -> ()
    %102 = vector.shape_cast %54 : vector<1x8x8xi1> to vector<1x8x8xi1>
    %103 = vector.broadcast %102 : vector<1x8x8xi1> to vector<2x8x8xi1>
    %104 = vector.broadcast %cst_37 : f32 to vector<2x8x8xf32>
    %105 = arith.select %103, %101, %104 : vector<2x8x8xi1>, vector<2x8x8xf32>
    %cst_38 = arith.constant dense<0xFF800000> : vector<2x8xf32>
    %106 = vector.multi_reduction <maximumf>, %105, %cst_38 [2] : vector<2x8x8xf32> to vector<2x8xf32>
    %107 = vector.shape_cast %106 : vector<2x8xf32> to vector<2x8x1xf32>
    %108 = vector.broadcast %107 : vector<2x8x1xf32> to vector<2x8x8xf32>
    %109 = arith.subf %105, %108 : vector<2x8x8xf32>
    %110 = math.exp %109 : vector<2x8x8xf32>
    %cst_39 = arith.constant dense<0.000000e+00> : vector<2x8xf32>
    %111 = vector.multi_reduction <add>, %110, %cst_39 [2] : vector<2x8x8xf32> to vector<2x8xf32>
    %112 = vector.shape_cast %111 : vector<2x8xf32> to vector<2x8x1xf32>
    %113 = tpu.reciprocal %112 {approx = true} : vector<2x8x1xf32> -> vector<2x8x1xf32>
    %114 = vector.broadcast %113 : vector<2x8x1xf32> to vector<2x8x8xf32>
    %115 = arith.mulf %110, %114 : vector<2x8x8xf32>
    %116 = arith.truncf %115 : vector<2x8x8xf32> to vector<2x8x8xbf16>
    %117 = vector.extract_strided_slice %50 {offsets = [0, 0, 16], sizes = [2, 8, 8], strides = [1, 1, 1]} : vector<2x8x32xbf16> to vector<2x8x8xbf16>
    "tpu.trace_start"() <{level = 10 : i32, message = "bqk,bkd->bqd"}> : () -> ()
    %cst_40 = arith.constant dense<0.000000e+00> : vector<2x8x8xf32>
    %118 = tpu.matmul %116, %117, %cst_40 {dimension_numbers = #tpu.dot_dimension_numbers<[2], [1], [1], [2], [0, 0, 0, 1, 1, 2], [0], [0]>} : vector<2x8x8xbf16>, vector<2x8x8xbf16>, vector<2x8x8xf32> -> vector<2x8x8xf32>
    "tpu.trace_stop"() : () -> ()
    %119 = arith.truncf %118 : vector<2x8x8xf32> to vector<2x8x8xbf16>
    %c0_41 = arith.constant 0 : index
    %c0_42 = arith.constant 0 : index
    %c16 = arith.constant 16 : index
    %120 = vector.load %arg22[%c0_41, %c0_42, %c16] : memref<2x8x32xbf16, #tpu.memory_space<vmem>>, vector<2x8x8xbf16>
    tpu.vector_store %arg22[%c0_41, %c0_42, %c16], %119 {strides = array<i32>} : memref<2x8x32xbf16, #tpu.memory_space<vmem>>, vector<2x8x8xbf16>,
    %121 = vector.extract_strided_slice %46 {offsets = [0, 0, 24], sizes = [2, 8, 8], strides = [1, 1, 1]} : vector<2x8x32xbf16> to vector<2x8x8xbf16>
    %122 = vector.extract_strided_slice %48 {offsets = [0, 0, 24], sizes = [2, 8, 8], strides = [1, 1, 1]} : vector<2x8x32xbf16> to vector<2x8x8xbf16>
    "tpu.trace_start"() <{level = 10 : i32, message = "bqd,bkd->bqk"}> : () -> ()
    %cst_43 = arith.constant dense<0.000000e+00> : vector<2x8x8xf32>
    %123 = tpu.matmul %121, %122, %cst_43 {dimension_numbers = #tpu.dot_dimension_numbers<[2], [2], [1], [1], [0, 0, 0, 1, 1, 1], [0], [0]>} : vector<2x8x8xbf16>, vector<2x8x8xbf16>, vector<2x8x8xf32> -> vector<2x8x8xf32>
    %cst_44 = arith.constant -1.000000e+30 : f32
    "tpu.trace_stop"() : () -> ()
    %124 = vector.shape_cast %54 : vector<1x8x8xi1> to vector<1x8x8xi1>
    %125 = vector.broadcast %124 : vector<1x8x8xi1> to vector<2x8x8xi1>
    %126 = vector.broadcast %cst_44 : f32 to vector<2x8x8xf32>
    %127 = arith.select %125, %123, %126 : vector<2x8x8xi1>, vector<2x8x8xf32>
    %cst_45 = arith.constant dense<0xFF800000> : vector<2x8xf32>
    %128 = vector.multi_reduction <maximumf>, %127, %cst_45 [2] : vector<2x8x8xf32> to vector<2x8xf32>
    %129 = vector.shape_cast %128 : vector<2x8xf32> to vector<2x8x1xf32>
    %130 = vector.broadcast %129 : vector<2x8x1xf32> to vector<2x8x8xf32>
    %131 = arith.subf %127, %130 : vector<2x8x8xf32>
    %132 = math.exp %131 : vector<2x8x8xf32>
    %cst_46 = arith.constant dense<0.000000e+00> : vector<2x8xf32>
    %133 = vector.multi_reduction <add>, %132, %cst_46 [2] : vector<2x8x8xf32> to vector<2x8xf32>
    %134 = vector.shape_cast %133 : vector<2x8xf32> to vector<2x8x1xf32>
    %135 = tpu.reciprocal %134 {approx = true} : vector<2x8x1xf32> -> vector<2x8x1xf32>
    %136 = vector.broadcast %135 : vector<2x8x1xf32> to vector<2x8x8xf32>
    %137 = arith.mulf %132, %136 : vector<2x8x8xf32>
    %138 = arith.truncf %137 : vector<2x8x8xf32> to vector<2x8x8xbf16>
    %139 = vector.extract_strided_slice %50 {offsets = [0, 0, 24], sizes = [2, 8, 8], strides = [1, 1, 1]} : vector<2x8x32xbf16> to vector<2x8x8xbf16>
    "tpu.trace_start"() <{level = 10 : i32, message = "bqk,bkd->bqd"}> : () -> ()
    %cst_47 = arith.constant dense<0.000000e+00> : vector<2x8x8xf32>
    %140 = tpu.matmul %138, %139, %cst_47 {dimension_numbers = #tpu.dot_dimension_numbers<[2], [1], [1], [2], [0, 0, 0, 1, 1, 2], [0], [0]>} : vector<2x8x8xbf16>, vector<2x8x8xbf16>, vector<2x8x8xf32> -> vector<2x8x8xf32>
    "tpu.trace_stop"() : () -> ()
    %141 = arith.truncf %140 : vector<2x8x8xf32> to vector<2x8x8xbf16>
    %c0_48 = arith.constant 0 : index
    %c0_49 = arith.constant 0 : index
    %c24 = arith.constant 24 : index
    %142 = vector.load %arg22[%c0_48, %c0_49, %c24] : memref<2x8x32xbf16, #tpu.memory_space<vmem>>, vector<2x8x8xbf16>
    tpu.vector_store %arg22[%c0_48, %c0_49, %c24], %141 {strides = array<i32>} : memref<2x8x32xbf16, #tpu.memory_space<vmem>>, vector<2x8x8xbf16>,
    %c0_50 = arith.constant 0 : index
    %c0_51 = arith.constant 0 : index
    %c0_52 = arith.constant 0 : index
    %143 = vector.load %arg22[%c0_50, %c0_51, %c0_52] : memref<2x8x32xbf16, #tpu.memory_space<vmem>>, vector<2x8x32xbf16>
    %144 = vector.shape_cast %143 : vector<2x8x32xbf16> to vector<16x32xbf16>
    %c0_53 = arith.constant 0 : index
    %c0_54 = arith.constant 0 : index
    %c0_55 = arith.constant 0 : index
    %145 = vector.load %arg9[%c0_53, %c0_54, %c0_55] : memref<1x32x32xbf16, #tpu.memory_space<vmem>>, vector<1x32x32xbf16>
    %146 = vector.shape_cast %145 : vector<1x32x32xbf16> to vector<32x32xbf16>
    %cst_56 = arith.constant dense<0.000000e+00> : vector<16x32xf32>
    %147 = tpu.matmul %144, %146, %cst_56 {dimension_numbers = #tpu.dot_dimension_numbers<[1], [0], [0], [1], [0, 0, 1, 1], [], []>} : vector<16x32xbf16>, vector<32x32xbf16>, vector<16x32xf32> -> vector<16x32xf32>
    %c0_57 = arith.constant 0 : index
    %c0_58 = arith.constant 0 : index
    %c0_59 = arith.constant 0 : index
    %148 = vector.load %arg10[%c0_57, %c0_58, %c0_59] : memref<1x1x32xf32, #tpu.memory_space<vmem>>, vector<1x1x32xf32>
    %149 = vector.shape_cast %148 : vector<1x1x32xf32> to vector<1x32xf32>
    %150 = vector.broadcast %149 : vector<1x32xf32> to vector<16x32xf32>
    %151 = arith.addf %147, %150 : vector<16x32xf32>
    %152 = vector.shape_cast %151 : vector<16x32xf32> to vector<2x8x32xf32>
    %153 = arith.addf %4, %152 : vector<2x8x32xf32>
    %c0_60 = arith.constant 0 : index
    %c0_61 = arith.constant 0 : index
    %c0_62 = arith.constant 0 : index
    %154 = vector.load %arg11[%c0_60, %c0_61, %c0_62] : memref<1x1x32xf32, #tpu.memory_space<vmem>>, vector<1x1x32xf32>
    %155 = vector.shape_cast %154 : vector<1x1x32xf32> to vector<32xf32>
    %c0_63 = arith.constant 0 : index
    %c0_64 = arith.constant 0 : index
    %c0_65 = arith.constant 0 : index
    %156 = vector.load %arg12[%c0_63, %c0_64, %c0_65] : memref<1x1x32xf32, #tpu.memory_space<vmem>>, vector<1x1x32xf32>
    %157 = vector.shape_cast %156 : vector<1x1x32xf32> to vector<32xf32>
    %cst_66 = arith.constant dense<0.000000e+00> : vector<2x8xf32>
    %158 = vector.multi_reduction <add>, %153, %cst_66 [2] : vector<2x8x32xf32> to vector<2x8xf32>
    %159 = vector.shape_cast %158 : vector<2x8xf32> to vector<2x8x1xf32>
    %cst_67 = arith.constant 3.200000e+01 : f32
    %160 = vector.broadcast %cst_67 : f32 to vector<2x8x1xf32>
    %161 = arith.divf %159, %160 : vector<2x8x1xf32>
    %162 = vector.broadcast %161 : vector<2x8x1xf32> to vector<2x8x32xf32>
    %163 = arith.subf %153, %162 : vector<2x8x32xf32>
    %164 = arith.mulf %163, %163 : vector<2x8x32xf32>
    %cst_68 = arith.constant dense<0.000000e+00> : vector<2x8xf32>
    %165 = vector.multi_reduction <add>, %164, %cst_68 [2] : vector<2x8x32xf32> to vector<2x8xf32>
    %166 = vector.shape_cast %165 : vector<2x8xf32> to vector<2x8x1xf32>
    %cst_69 = arith.constant 3.200000e+01 : f32
    %167 = vector.broadcast %cst_69 : f32 to vector<2x8x1xf32>
    %168 = arith.divf %166, %167 : vector<2x8x1xf32>
    %169 = vector.broadcast %161 : vector<2x8x1xf32> to vector<2x8x32xf32>
    %170 = arith.subf %153, %169 : vector<2x8x32xf32>
    %cst_70 = arith.constant 9.99999974E-6 : f32
    %171 = vector.broadcast %cst_70 : f32 to vector<2x8x1xf32>
    %172 = arith.addf %168, %171 : vector<2x8x1xf32>
    %173 = math.rsqrt %172 : vector<2x8x1xf32>
    %174 = vector.broadcast %173 : vector<2x8x1xf32> to vector<2x8x32xf32>
    %175 = arith.mulf %170, %174 : vector<2x8x32xf32>
    %176 = vector.shape_cast %155 : vector<32xf32> to vector<1x1x32xf32>
    %177 = vector.broadcast %176 : vector<1x1x32xf32> to vector<2x8x32xf32>
    %178 = arith.mulf %175, %177 : vector<2x8x32xf32>
    %179 = vector.shape_cast %157 : vector<32xf32> to vector<1x1x32xf32>
    %180 = vector.broadcast %179 : vector<1x1x32xf32> to vector<2x8x32xf32>
    %181 = arith.addf %178, %180 : vector<2x8x32xf32>
    %182 = vector.shape_cast %181 : vector<2x8x32xf32> to vector<16x32xf32>
    %c0_71 = arith.constant 0 : index
    %c0_72 = arith.constant 0 : index
    %c0_73 = arith.constant 0 : index
    %183 = vector.load %arg13[%c0_71, %c0_72, %c0_73] : memref<1x32x128xbf16, #tpu.memory_space<vmem>>, vector<1x32x128xbf16>
    %184 = vector.shape_cast %183 : vector<1x32x128xbf16> to vector<32x128xbf16>
    %185 = arith.truncf %182 : vector<16x32xf32> to vector<16x32xbf16>
    %cst_74 = arith.constant dense<0.000000e+00> : vector<16x128xf32>
    %186 = tpu.matmul %185, %184, %cst_74 {dimension_numbers = #tpu.dot_dimension_numbers<[1], [0], [0], [1], [0, 0, 1, 1], [], []>} : vector<16x32xbf16>, vector<32x128xbf16>, vector<16x128xf32> -> vector<16x128xf32>
    %c0_75 = arith.constant 0 : index
    %c0_76 = arith.constant 0 : index
    %c0_77 = arith.constant 0 : index
    %187 = vector.load %arg14[%c0_75, %c0_76, %c0_77] : memref<1x1x128xf32, #tpu.memory_space<vmem>>, vector<1x1x128xf32>
    %188 = vector.shape_cast %187 : vector<1x1x128xf32> to vector<1x128xf32>
    %189 = vector.broadcast %188 : vector<1x128xf32> to vector<16x128xf32>
    %190 = arith.addf %186, %189 : vector<16x128xf32>
    %191 = arith.truncf %190 : vector<16x128xf32> to vector<16x128xbf16>
    %cst_78 = arith.constant 1.703130e+00 : bf16
    %192 = vector.broadcast %cst_78 : bf16 to vector<16x128xbf16>
    %193 = arith.mulf %192, %191 : vector<16x128xbf16>
    %194 = arith.negf %193 : vector<16x128xbf16>
    %195 = math.exp %194 : vector<16x128xbf16>
    %cst_79 = arith.constant 1.000000e+00 : bf16
    %196 = vector.broadcast %cst_79 : bf16 to vector<16x128xbf16>
    %197 = arith.addf %196, %195 : vector<16x128xbf16>
    %198 = arith.divf %196, %197 : vector<16x128xbf16>
    %199 = arith.mulf %191, %198 : vector<16x128xbf16>
    %c0_80 = arith.constant 0 : index
    %c0_81 = arith.constant 0 : index
    %c0_82 = arith.constant 0 : index
    %200 = vector.load %arg15[%c0_80, %c0_81, %c0_82] : memref<1x128x32xbf16, #tpu.memory_space<vmem>>, vector<1x128x32xbf16>
    %201 = vector.shape_cast %200 : vector<1x128x32xbf16> to vector<128x32xbf16>
    %cst_83 = arith.constant dense<0.000000e+00> : vector<16x32xf32>
    %202 = tpu.matmul %199, %201, %cst_83 {dimension_numbers = #tpu.dot_dimension_numbers<[1], [0], [0], [1], [0, 0, 1, 1], [], []>} : vector<16x128xbf16>, vector<128x32xbf16>, vector<16x32xf32> -> vector<16x32xf32>
    %c0_84 = arith.constant 0 : index
    %c0_85 = arith.constant 0 : index
    %c0_86 = arith.constant 0 : index
    %203 = vector.load %arg16[%c0_84, %c0_85, %c0_86] : memref<1x1x32xf32, #tpu.memory_space<vmem>>, vector<1x1x32xf32>
    %204 = vector.shape_cast %203 : vector<1x1x32xf32> to vector<1x32xf32>
    %205 = vector.broadcast %204 : vector<1x32xf32> to vector<16x32xf32>
    %206 = arith.addf %202, %205 : vector<16x32xf32>
    %207 = vector.shape_cast %206 : vector<16x32xf32> to vector<2x8x32xf32>
    %208 = arith.addf %153, %207 : vector<2x8x32xf32>
    %c0_87 = arith.constant 0 : index
    %c0_88 = arith.constant 0 : index
    %c0_89 = arith.constant 0 : index
    %209 = vector.load %arg21[%c0_87, %c0_88, %c0_89] : memref<2x8x32xf32, #tpu.memory_space<vmem>>, vector<2x8x32xf32>
    tpu.vector_store %arg21[%c0_87, %c0_88, %c0_89], %208 {strides = array<i32>} : memref<2x8x32xf32, #tpu.memory_space<vmem>>, vector<2x8x32xf32>,
    %c1_i32 = arith.constant 1 : i32
    %210 = arith.cmpi eq, %arg1, %c1_i32 : i32
    %211 = arith.extui %210 : i1 to i32
    %c0_i32_90 = arith.constant 0 : i32
    %212 = arith.cmpi ne, %211, %c0_i32_90 : i32
    scf.if %212 {
      %c0_i32_91 = arith.constant 0 : i32
      %213 = arith.addi %0, %c0_i32_91 : i32
      %214 = arith.index_cast %213 : i32 to index
      %215 = memref.load %arg2[%214] : memref<2xi32, #tpu.memory_space<smem>>
      %c0_92 = arith.constant 0 : index
      %216 = arith.index_cast %215 : i32 to index
      %c0_93 = arith.constant 0 : index
      %217 = vector.load %arg21[%c0_92, %216, %c0_93] : memref<2x8x32xf32, #tpu.memory_space<vmem>>, vector<1x1x32xf32>
      %218 = vector.shape_cast %217 : vector<1x1x32xf32> to vector<1x32xf32>
      %c0_94 = arith.constant 0 : index
      %c0_95 = arith.constant 0 : index
      %219 = vector.load %arg23[%c0_94, %c0_95] : memref<2x32xf32, #tpu.memory_space<vmem>>, vector<1x32xf32>
      tpu.vector_store %arg23[%c0_94, %c0_95], %218 {strides = array<i32>} : memref<2x32xf32, #tpu.memory_space<vmem>>, vector<1x32xf32>,
      %c1_i32_96 = arith.constant 1 : i32
      %220 = arith.addi %0, %c1_i32_96 : i32
      %221 = arith.index_cast %220 : i32 to index
      %222 = memref.load %arg2[%221] : memref<2xi32, #tpu.memory_space<smem>>
      %c1 = arith.constant 1 : index
      %223 = arith.index_cast %222 : i32 to index
      %c0_97 = arith.constant 0 : index
      %224 = vector.load %arg21[%c1, %223, %c0_97] : memref<2x8x32xf32, #tpu.memory_space<vmem>>, vector<1x1x32xf32>
      %225 = vector.shape_cast %224 : vector<1x1x32xf32> to vector<1x32xf32>
      %c1_98 = arith.constant 1 : index
      %c0_99 = arith.constant 0 : index
      %226 = vector.load %arg23[%c1_98, %c0_99] : memref<2x32xf32, #tpu.memory_space<vmem>>, vector<1x32xf32>
      tpu.vector_store %arg23[%c1_98, %c0_99], %225 {strides = array<i32>} : memref<2x32xf32, #tpu.memory_space<vmem>>, vector<1x32xf32>,
      %c0_100 = arith.constant 0 : index
      %c0_101 = arith.constant 0 : index
      %227 = vector.load %arg23[%c0_100, %c0_101] : memref<2x32xf32, #tpu.memory_space<vmem>>, vector<2x32xf32>
      %c0_102 = arith.constant 0 : index
      %c0_103 = arith.constant 0 : index
      %228 = vector.load %arg17[%c0_102, %c0_103] : memref<1x32xf32, #tpu.memory_space<vmem>>, vector<1x32xf32>
      %229 = vector.shape_cast %228 : vector<1x32xf32> to vector<32xf32>
      %c0_104 = arith.constant 0 : index
      %c0_105 = arith.constant 0 : index
      %230 = vector.load %arg18[%c0_104, %c0_105] : memref<1x32xf32, #tpu.memory_space<vmem>>, vector<1x32xf32>
      %231 = vector.shape_cast %230 : vector<1x32xf32> to vector<32xf32>
      %cst_106 = arith.constant dense<0.000000e+00> : vector<2xf32>
      %232 = vector.multi_reduction <add>, %227, %cst_106 [1] : vector<2x32xf32> to vector<2xf32>
      %233 = vector.shape_cast %232 : vector<2xf32> to vector<2x1xf32>
      %cst_107 = arith.constant 3.200000e+01 : f32
      %234 = vector.broadcast %cst_107 : f32 to vector<2x1xf32>
      %235 = arith.divf %233, %234 : vector<2x1xf32>
      %236 = vector.broadcast %235 : vector<2x1xf32> to vector<2x32xf32>
      %237 = arith.subf %227, %236 : vector<2x32xf32>
      %238 = arith.mulf %237, %237 : vector<2x32xf32>
      %cst_108 = arith.constant dense<0.000000e+00> : vector<2xf32>
      %239 = vector.multi_reduction <add>, %238, %cst_108 [1] : vector<2x32xf32> to vector<2xf32>
      %240 = vector.shape_cast %239 : vector<2xf32> to vector<2x1xf32>
      %cst_109 = arith.constant 3.200000e+01 : f32
      %241 = vector.broadcast %cst_109 : f32 to vector<2x1xf32>
      %242 = arith.divf %240, %241 : vector<2x1xf32>
      %243 = vector.broadcast %235 : vector<2x1xf32> to vector<2x32xf32>
      %244 = arith.subf %227, %243 : vector<2x32xf32>
      %cst_110 = arith.constant 9.99999974E-6 : f32
      %245 = vector.broadcast %cst_110 : f32 to vector<2x1xf32>
      %246 = arith.addf %242, %245 : vector<2x1xf32>
      %247 = math.rsqrt %246 : vector<2x1xf32>
      %248 = vector.broadcast %247 : vector<2x1xf32> to vector<2x32xf32>
      %249 = arith.mulf %244, %248 : vector<2x32xf32>
      %250 = vector.shape_cast %229 : vector<32xf32> to vector<1x32xf32>
      %251 = vector.broadcast %250 : vector<1x32xf32> to vector<2x32xf32>
      %252 = arith.mulf %249, %251 : vector<2x32xf32>
      %253 = vector.shape_cast %231 : vector<32xf32> to vector<1x32xf32>
      %254 = vector.broadcast %253 : vector<1x32xf32> to vector<2x32xf32>
      %255 = arith.addf %252, %254 : vector<2x32xf32>
      %c0_111 = arith.constant 0 : index
      %c0_112 = arith.constant 0 : index
      %256 = vector.load %arg19[%c0_111, %c0_112] : memref<32x32xbf16, #tpu.memory_space<vmem>>, vector<32x32xbf16>
      %257 = arith.truncf %255 : vector<2x32xf32> to vector<2x32xbf16>
      %cst_113 = arith.constant dense<0.000000e+00> : vector<2x32xf32>
      %258 = tpu.matmul %257, %256, %cst_113 {dimension_numbers = #tpu.dot_dimension_numbers<[1], [0], [0], [1], [0, 0, 1, 1], [], []>} : vector<2x32xbf16>, vector<32x32xbf16>, vector<2x32xf32> -> vector<2x32xf32>
      %c0_114 = arith.constant 0 : index
      %c0_115 = arith.constant 0 : index
      %259 = vector.load %arg20[%c0_114, %c0_115] : memref<2x32xf32, #tpu.memory_space<vmem>>, vector<2x32xf32>
      tpu.vector_store %arg20[%c0_114, %c0_115], %258 {strides = array<i32>} : memref<2x32xf32, #tpu.memory_space<vmem>>, vector<2x32xf32>,
    } else {
    }
    return
  }
  func.func @transform_0(%arg0: i32, %arg1: i32, %arg2: memref<2xi32, #tpu.memory_space<smem>>) -> (i32, i32, i32) {
    %c0_i32 = arith.constant 0 : i32
    %c0_i32_0 = arith.constant 0 : i32
    %c0_i32_1 = arith.constant 0 : i32
    return %arg0, %c0_i32, %c0_i32_0 : i32, i32, i32
  }
  func.func @transform_1(%arg0: i32, %arg1: i32, %arg2: memref<2xi32, #tpu.memory_space<smem>>) -> (i32, i32) {
    %c0_i32 = arith.constant 0 : i32
    %c0_i32_0 = arith.constant 0 : i32
    %c0_i32_1 = arith.constant 0 : i32
    return %c0_i32, %c0_i32_0 : i32, i32
  }
  func.func @transform_2(%arg0: i32, %arg1: i32, %arg2: memref<2xi32, #tpu.memory_space<smem>>) -> (i32, i32, i32) {
    %c0_i32 = arith.constant 0 : i32
    %c0_i32_0 = arith.constant 0 : i32
    %c0_i32_1 = arith.constant 0 : i32
    return %arg1, %c0_i32, %c0_i32_0 : i32, i32, i32
  }
  func.func @transform_3(%arg0: i32, %arg1: i32, %arg2: memref<2xi32, #tpu.memory_space<smem>>) -> (i32, i32, i32) {
    %c0_i32 = arith.constant 0 : i32
    %c0_i32_0 = arith.constant 0 : i32
    %c0_i32_1 = arith.constant 0 : i32
    return %arg1, %c0_i32, %c0_i32_0 : i32, i32, i32
  }
  func.func @transform_4(%arg0: i32, %arg1: i32, %arg2: memref<2xi32, #tpu.memory_space<smem>>) -> (i32, i32, i32) {
    %c0_i32 = arith.constant 0 : i32
    %c0_i32_0 = arith.constant 0 : i32
    %c0_i32_1 = arith.constant 0 : i32
    return %arg1, %c0_i32, %c0_i32_0 : i32, i32, i32
  }
  func.func @transform_5(%arg0: i32, %arg1: i32, %arg2: memref<2xi32, #tpu.memory_space<smem>>) -> (i32, i32, i32) {
    %c0_i32 = arith.constant 0 : i32
    %c0_i32_0 = arith.constant 0 : i32
    %c0_i32_1 = arith.constant 0 : i32
    return %arg1, %c0_i32, %c0_i32_0 : i32, i32, i32
  }
  func.func @transform_6(%arg0: i32, %arg1: i32, %arg2: memref<2xi32, #tpu.memory_space<smem>>) -> (i32, i32, i32) {
    %c0_i32 = arith.constant 0 : i32
    %c0_i32_0 = arith.constant 0 : i32
    %c0_i32_1 = arith.constant 0 : i32
    return %arg1, %c0_i32, %c0_i32_0 : i32, i32, i32
  }
  func.func @transform_7(%arg0: i32, %arg1: i32, %arg2: memref<2xi32, #tpu.memory_space<smem>>) -> (i32, i32, i32) {
    %c0_i32 = arith.constant 0 : i32
    %c0_i32_0 = arith.constant 0 : i32
    %c0_i32_1 = arith.constant 0 : i32
    return %arg1, %c0_i32, %c0_i32_0 : i32, i32, i32
  }
  func.func @transform_8(%arg0: i32, %arg1: i32, %arg2: memref<2xi32, #tpu.memory_space<smem>>) -> (i32, i32, i32) {
    %c0_i32 = arith.constant 0 : i32
    %c0_i32_0 = arith.constant 0 : i32
    %c0_i32_1 = arith.constant 0 : i32
    return %arg1, %c0_i32, %c0_i32_0 : i32, i32, i32
  }
  func.func @transform_9(%arg0: i32, %arg1: i32, %arg2: memref<2xi32, #tpu.memory_space<smem>>) -> (i32, i32, i32) {
    %c0_i32 = arith.constant 0 : i32
    %c0_i32_0 = arith.constant 0 : i32
    %c0_i32_1 = arith.constant 0 : i32
    return %arg1, %c0_i32, %c0_i32_0 : i32, i32, i32
  }
  func.func @transform_10(%arg0: i32, %arg1: i32, %arg2: memref<2xi32, #tpu.memory_space<smem>>) -> (i32, i32, i32) {
    %c0_i32 = arith.constant 0 : i32
    %c0_i32_0 = arith.constant 0 : i32
    %c0_i32_1 = arith.constant 0 : i32
    return %arg1, %c0_i32, %c0_i32_0 : i32, i32, i32
  }
  func.func @transform_11(%arg0: i32, %arg1: i32, %arg2: memref<2xi32, #tpu.memory_space<smem>>) -> (i32, i32, i32) {
    %c0_i32 = arith.constant 0 : i32
    %c0_i32_0 = arith.constant 0 : i32
    %c0_i32_1 = arith.constant 0 : i32
    return %arg1, %c0_i32, %c0_i32_0 : i32, i32, i32
  }
  func.func @transform_12(%arg0: i32, %arg1: i32, %arg2: memref<2xi32, #tpu.memory_space<smem>>) -> (i32, i32, i32) {
    %c0_i32 = arith.constant 0 : i32
    %c0_i32_0 = arith.constant 0 : i32
    %c0_i32_1 = arith.constant 0 : i32
    return %arg1, %c0_i32, %c0_i32_0 : i32, i32, i32
  }
  func.func @transform_13(%arg0: i32, %arg1: i32, %arg2: memref<2xi32, #tpu.memory_space<smem>>) -> (i32, i32, i32) {
    %c0_i32 = arith.constant 0 : i32
    %c0_i32_0 = arith.constant 0 : i32
    %c0_i32_1 = arith.constant 0 : i32
    return %arg1, %c0_i32, %c0_i32_0 : i32, i32, i32
  }
  func.func @transform_14(%arg0: i32, %arg1: i32, %arg2: memref<2xi32, #tpu.memory_space<smem>>) -> (i32, i32) {
    %c0_i32 = arith.constant 0 : i32
    %c0_i32_0 = arith.constant 0 : i32
    %c0_i32_1 = arith.constant 0 : i32
    return %c0_i32, %c0_i32_0 : i32, i32
  }
  func.func @transform_15(%arg0: i32, %arg1: i32, %arg2: memref<2xi32, #tpu.memory_space<smem>>) -> (i32, i32) {
    %c0_i32 = arith.constant 0 : i32
    %c0_i32_0 = arith.constant 0 : i32
    %c0_i32_1 = arith.constant 0 : i32
    return %c0_i32, %c0_i32_0 : i32, i32
  }
  func.func @transform_16(%arg0: i32, %arg1: i32, %arg2: memref<2xi32, #tpu.memory_space<smem>>) -> (i32, i32) {
    %c0_i32 = arith.constant 0 : i32
    %c0_i32_0 = arith.constant 0 : i32
    %c0_i32_1 = arith.constant 0 : i32
    return %c0_i32, %c0_i32_0 : i32, i32
  }
  func.func @transform_17(%arg0: i32, %arg1: i32, %arg2: memref<2xi32, #tpu.memory_space<smem>>) -> (i32, i32) {
    %c0_i32 = arith.constant 0 : i32
    %c0_i32_0 = arith.constant 0 : i32
    return %arg0, %c0_i32 : i32, i32
  }
}

</mosaic_0001>

<llo_original>
// kernel: tpu_custom_call.1
$region0: #{tpu_custom_call.1}
  #allocation0 [shape = 'u32[]', space=smem, size = 0x4, offset = 0x4, fixed_abs, tag = 'smem constant byte address 0x4 - core index']
  #allocation1 [shape = 'u32[72,128]{1,0:T(1,128)}', space=vmem, size = 0x9000, scoped, tag = 'internal scratch']
  #allocation2 [shape = 'f32[2,8,32]{2,1,0:T(8,128)}', space=vmem, size = 0x2000, scoped, tag = 'scratch operand']
  #allocation3 [shape = 'bf16[2,8,32]{2,1,0:T(8,128)(2,1)}', space=vmem, size = 0x1000, scoped, tag = 'scratch operand']
  #allocation4 [shape = 'f32[2,32]{1,0:T(2,128)}', space=vmem, size = 0x400, scoped, tag = 'scratch operand']
  #allocation5 [shape = 's32[1]{0}', space=sflag, size = 0x4, scoped, tag = 'scoped memory for tpu_custom_call.1']
  #allocation6 [shape = 'u8[512]{0}', space=smem, size = 0x200, scoped, tag = 'prefetched SMEM operand 0']
  %s0 = inlined_call_operand.vmem [shape: s32[2], index: 0, kind: input, shape index: {}]
  %s1 = inlined_call_operand.vmem [shape: f32[2,8,32], index: 1, kind: input, shape index: {}]
  %s2 = inlined_call_operand.vmem [shape: f32[8,32], index: 2, kind: input, shape index: {}]
  %s3 = inlined_call_operand.vmem [shape: f32[2,1,32], index: 3, kind: input, shape index: {}]
  %s4 = inlined_call_operand.vmem [shape: f32[2,1,32], index: 4, kind: input, shape index: {}]
  %s5 = inlined_call_operand.vmem [shape: bf16[2,32,96], index: 5, kind: input, shape index: {}]
  %s6 = inlined_call_operand.vmem [shape: f32[2,1,96], index: 6, kind: input, shape index: {}]
  %s7 = inlined_call_operand.vmem [shape: bf16[2,32,32], index: 7, kind: input, shape index: {}]
  %s8 = inlined_call_operand.vmem [shape: f32[2,1,32], index: 8, kind: input, shape index: {}]
  %s9 = inlined_call_operand.vmem [shape: f32[2,1,32], index: 9, kind: input, shape index: {}]
  %s10 = inlined_call_operand.vmem [shape: f32[2,1,32], index: 10, kind: input, shape index: {}]
  %s11 = inlined_call_operand.vmem [shape: bf16[2,32,128], index: 11, kind: input, shape index: {}]
  %s12 = inlined_call_operand.vmem [shape: f32[2,1,128], index: 12, kind: input, shape index: {}]
  %s13 = inlined_call_operand.vmem [shape: bf16[2,128,32], index: 13, kind: input, shape index: {}]
  %s14 = inlined_call_operand.vmem [shape: f32[2,1,32], index: 14, kind: input, shape index: {}]
  %s15 = inlined_call_operand.vmem [shape: f32[1,32], index: 15, kind: input, shape index: {}]
  %s16 = inlined_call_operand.vmem [shape: f32[1,32], index: 16, kind: input, shape index: {}]
  %s17 = inlined_call_operand.vmem [shape: bf16[32,32], index: 17, kind: input, shape index: {}]
  %s18 = inlined_call_operand.hbm [shape: f32[2,32], index: 18, kind: output, shape index: {}]
  %s19 = sld [smem:[#allocation0]]
  $region109: #{tpu_custom_call.1} parent=0
    _
  %s21 = ssub.s32 1, %s19
  %s22 = scalar_select 0, %s21, %s19
  %s24 = sshll.u32 %s0, 4
  %s25 = int_to_ptr.vmem [resolvable:$true] %s24
  %27 = dma.vmem_to_smem %s25, 16, [#allocation6], [#allocation5]
  %29 = dma.done [#allocation5], 16
  %30 = sfence
  $region1: #{tpu_custom_call.1} parent=0
    #allocation7 [shape = 'u8[1024]{0}', space=vmem, size = 0x400, scoped, tag = 'output window, operand 0, single buffered']
    #allocation8 [shape = 's32[2]{0}', space=sflag, size = 0x8, scoped, tag = 'scoped memory for tpu_custom_call.1']
    %31 = vsyncpa [#allocation8], 0
    loop: start=0, step=1, limit=4
    $region2: #{tpu_custom_call.1} parent=1 // loop_pre_header
      _
    $region3: #{tpu_custom_call.1} parent=1 // loop_header
      %s33 = sphi 0, %s37
      %p34 = scmp.ge.s32.totalorder %s33, 4
      %s40 = sphi 0, %s52
      %s41 = sphi 0, %s48
      %s42 = sphi 0, %s40
      %s43 = sphi 0, %s41
      %s44 = sphi 0, %s42
      %s45 = sphi 0, %s43
      %s55 = sphi 0, %s57
      %s58 = sphi 0, %s55
      %s59 = sphi 0, %s58
      %s75 = sphi 0, %s59
      %s79 = sphi 0, %s79
      %s81 = sphi 0, %s79
      %s82 = sphi 0, %s81
      %s96 = sphi 0, %s82
      %s102 = sphi 0, %s104
      %s105 = sphi 0, %s102
      %s106 = sphi 0, %s105
      %s122 = sphi 0, %s106
      %s128 = sphi 0, %s130
      %s131 = sphi 0, %s128
      %s132 = sphi 0, %s131
      %s148 = sphi 0, %s132
      %s154 = sphi 0, %s156
      %s157 = sphi 0, %s154
      %s158 = sphi 0, %s157
      %s174 = sphi 0, %s158
      %s180 = sphi 0, %s182
      %s183 = sphi 0, %s180
      %s184 = sphi 0, %s183
      %s200 = sphi 0, %s184
      %s206 = sphi 0, %s208
      %s209 = sphi 0, %s206
      %s210 = sphi 0, %s209
      %s226 = sphi 0, %s210
      %s232 = sphi 0, %s234
      %s235 = sphi 0, %s232
      %s236 = sphi 0, %s235
      %s252 = sphi 0, %s236
      %s258 = sphi 0, %s260
      %s261 = sphi 0, %s258
      %s262 = sphi 0, %s261
      %s278 = sphi 0, %s262
      %s284 = sphi 0, %s286
      %s287 = sphi 0, %s284
      %s288 = sphi 0, %s287
      %s304 = sphi 0, %s288
      %s310 = sphi 0, %s312
      %s313 = sphi 0, %s310
      %s314 = sphi 0, %s313
      %s330 = sphi 0, %s314
      %s336 = sphi 0, %s338
      %s339 = sphi 0, %s336
      %s340 = sphi 0, %s339
      %s356 = sphi 0, %s340
      %s362 = sphi 0, %s364
      %s365 = sphi 0, %s362
      %s366 = sphi 0, %s365
      %s382 = sphi 0, %s366
      %s388 = sphi 0, %s390
      %s391 = sphi 0, %s388
      %s392 = sphi 0, %s391
      %s408 = sphi 0, %s392
      %s412 = sphi 0, %s412
      %s414 = sphi 0, %s412
      %s415 = sphi 0, %s414
      %s429 = sphi 0, %s415
      %s433 = sphi 0, %s433
      %s435 = sphi 0, %s433
      %s436 = sphi 0, %s435
      %s450 = sphi 0, %s436
      %s454 = sphi 0, %s454
      %s456 = sphi 0, %s454
      %s457 = sphi 0, %s456
      %s471 = sphi 0, %s457
      %s477 = sphi 0, %s479
      %s480 = sphi 0, %s477
      %s481 = sphi 0, %s480
      %s497 = sphi 0, %s481
    $region4: #{tpu_custom_call.1} parent=1 // loop_header_branch
      %36 = sbr.rel (%p34) target = $region8
    $region5: #{tpu_custom_call.1} parent=1 // loop_body
      %s38 = ssub.s32 %s33, 1
      %s39 = ssub.s32 %s33, 2
      %s46 = sadd.s32 1, %s41
      %p47 = scmp.ge.s32.totalorder %s46, 2
      %s48 = scalar_select %p47, 0, %s46
      %s49 = sadd.s32 1, %s40
      %s50 = scalar_select %p47, %s49, %s40
      %p51 = scmp.ge.s32.totalorder %s50, 1
      %s52 = scalar_select %p51, 0, %s50
      %s53 = ssub.s32 %s40, %s52
      %p54 = scmp.eq.s32.totalorder %s53, 0
      %s56 = sadd.s32 %s55, 1
      %s57 = scalar_select %p54, %s55, %s56
      %p60 = pneg %p54
      %p61 = scmp.eq.s32.totalorder %s33, 1
      %p62 = por %p60, %p61
      %p63 = scmp.ne.s32.totalorder %s55, %s58
      %p64 = scmp.eq.s32.totalorder %s33, 0
      %p65 = por %p63, %p64
      %p66 = scmp.ne.s32.totalorder %s55, %s58
      %p67 = scmp.eq.s32.totalorder %s38, 1
      %p68 = por %p66, %p67
      %p69 = scmp.ne.s32.totalorder %s58, %s59
      %p70 = scmp.eq.s32.totalorder %s38, 0
      %p71 = por %p69, %p70
      %p72 = scmp.ne.s32.totalorder %s58, %s59
      %p73 = scmp.eq.s32.totalorder %s39, 1
      %p74 = por %p72, %p73
      %p76 = scmp.ne.s32.totalorder %s59, %s75
      %p77 = scmp.eq.s32.totalorder %s39, 0
      %p78 = por %p76, %p77
      %s80 = sadd.s32 %s79, 1
      %p83 = scmp.eq.s32.totalorder %s33, 1
      %p84 = scmp.ne.s32.totalorder %s79, %s81
      %p85 = scmp.eq.s32.totalorder %s33, 0
      %p86 = por %p84, %p85
      %p87 = scmp.ne.s32.totalorder %s79, %s81
      %p88 = scmp.eq.s32.totalorder %s38, 1
      %p89 = por %p87, %p88
      %p90 = scmp.ne.s32.totalorder %s81, %s82
      %p91 = scmp.eq.s32.totalorder %s38, 0
      %p92 = por %p90, %p91
      %p93 = scmp.ne.s32.totalorder %s81, %s82
      %p94 = scmp.eq.s32.totalorder %s39, 1
      %p95 = por %p93, %p94
      %p97 = scmp.ne.s32.totalorder %s82, %s96
      %p98 = scmp.eq.s32.totalorder %s39, 0
      %p99 = por %p97, %p98
      %s100 = ssub.s32 %s41, %s48
      %p101 = scmp.eq.s32.totalorder %s100, 0
      %s103 = sadd.s32 %s102, 1
      %s104 = scalar_select %p101, %s102, %s103
      %p107 = pneg %p101
      %p108 = scmp.eq.s32.totalorder %s33, 1
      %p109 = por %p107, %p108
      %p110 = scmp.ne.s32.totalorder %s102, %s105
      %p111 = scmp.eq.s32.totalorder %s33, 0
      %p112 = por %p110, %p111
      %p113 = scmp.ne.s32.totalorder %s102, %s105
      %p114 = scmp.eq.s32.totalorder %s38, 1
      %p115 = por %p113, %p114
      %p116 = scmp.ne.s32.totalorder %s105, %s106
      %p117 = scmp.eq.s32.totalorder %s38, 0
      %p118 = por %p116, %p117
      %p119 = scmp.ne.s32.totalorder %s105, %s106
      %p120 = scmp.eq.s32.totalorder %s39, 1
      %p121 = por %p119, %p120
      %p123 = scmp.ne.s32.totalorder %s106, %s122
      %p124 = scmp.eq.s32.totalorder %s39, 0
      %p125 = por %p123, %p124
      %s126 = ssub.s32 %s41, %s48
      %p127 = scmp.eq.s32.totalorder %s126, 0
      %s129 = sadd.s32 %s128, 1
      %s130 = scalar_select %p127, %s128, %s129
      %p133 = pneg %p127
      %p134 = scmp.eq.s32.totalorder %s33, 1
      %p135 = por %p133, %p134
      %p136 = scmp.ne.s32.totalorder %s128, %s131
      %p137 = scmp.eq.s32.totalorder %s33, 0
      %p138 = por %p136, %p137
      %p139 = scmp.ne.s32.totalorder %s128, %s131
      %p140 = scmp.eq.s32.totalorder %s38, 1
      %p141 = por %p139, %p140
      %p142 = scmp.ne.s32.totalorder %s131, %s132
      %p143 = scmp.eq.s32.totalorder %s38, 0
      %p144 = por %p142, %p143
      %p145 = scmp.ne.s32.totalorder %s131, %s132
      %p146 = scmp.eq.s32.totalorder %s39, 1
      %p147 = por %p145, %p146
      %p149 = scmp.ne.s32.totalorder %s132, %s148
      %p150 = scmp.eq.s32.totalorder %s39, 0
      %p151 = por %p149, %p150
      %s152 = ssub.s32 %s41, %s48
      %p153 = scmp.eq.s32.totalorder %s152, 0
      %s155 = sadd.s32 %s154, 1
      %s156 = scalar_select %p153, %s154, %s155
      %p159 = pneg %p153
      %p160 = scmp.eq.s32.totalorder %s33, 1
      %p161 = por %p159, %p160
      %p162 = scmp.ne.s32.totalorder %s154, %s157
      %p163 = scmp.eq.s32.totalorder %s33, 0
      %p164 = por %p162, %p163
      %p165 = scmp.ne.s32.totalorder %s154, %s157
      %p166 = scmp.eq.s32.totalorder %s38, 1
      %p167 = por %p165, %p166
      %p168 = scmp.ne.s32.totalorder %s157, %s158
      %p169 = scmp.eq.s32.totalorder %s38, 0
      %p170 = por %p168, %p169
      %p171 = scmp.ne.s32.totalorder %s157, %s158
      %p172 = scmp.eq.s32.totalorder %s39, 1
      %p173 = por %p171, %p172
      %p175 = scmp.ne.s32.totalorder %s158, %s174
      %p176 = scmp.eq.s32.totalorder %s39, 0
      %p177 = por %p175, %p176
      %s178 = ssub.s32 %s41, %s48
      %p179 = scmp.eq.s32.totalorder %s178, 0
      %s181 = sadd.s32 %s180, 1
      %s182 = scalar_select %p179, %s180, %s181
      %p185 = pneg %p179
      %p186 = scmp.eq.s32.totalorder %s33, 1
      %p187 = por %p185, %p186
      %p188 = scmp.ne.s32.totalorder %s180, %s183
      %p189 = scmp.eq.s32.totalorder %s33, 0
      %p190 = por %p188, %p189
      %p191 = scmp.ne.s32.totalorder %s180, %s183
      %p192 = scmp.eq.s32.totalorder %s38, 1
      %p193 = por %p191, %p192
      %p194 = scmp.ne.s32.totalorder %s183, %s184
      %p195 = scmp.eq.s32.totalorder %s38, 0
      %p196 = por %p194, %p195
      %p197 = scmp.ne.s32.totalorder %s183, %s184
      %p198 = scmp.eq.s32.totalorder %s39, 1
      %p199 = por %p197, %p198
      %p201 = scmp.ne.s32.totalorder %s184, %s200
      %p202 = scmp.eq.s32.totalorder %s39, 0
      %p203 = por %p201, %p202
      %s204 = ssub.s32 %s41, %s48
      %p205 = scmp.eq.s32.totalorder %s204, 0
      %s207 = sadd.s32 %s206, 1
      %s208 = scalar_select %p205, %s206, %s207
      %p211 = pneg %p205
      %p212 = scmp.eq.s32.totalorder %s33, 1
      %p213 = por %p211, %p212
      %p214 = scmp.ne.s32.totalorder %s206, %s209
      %p215 = scmp.eq.s32.totalorder %s33, 0
      %p216 = por %p214, %p215
      %p217 = scmp.ne.s32.totalorder %s206, %s209
      %p218 = scmp.eq.s32.totalorder %s38, 1
      %p219 = por %p217, %p218
      %p220 = scmp.ne.s32.totalorder %s209, %s210
      %p221 = scmp.eq.s32.totalorder %s38, 0
      %p222 = por %p220, %p221
      %p223 = scmp.ne.s32.totalorder %s209, %s210
      %p224 = scmp.eq.s32.totalorder %s39, 1
      %p225 = por %p223, %p224
      %p227 = scmp.ne.s32.totalorder %s210, %s226
      %p228 = scmp.eq.s32.totalorder %s39, 0
      %p229 = por %p227, %p228
      %s230 = ssub.s32 %s41, %s48
      %p231 = scmp.eq.s32.totalorder %s230, 0
      %s233 = sadd.s32 %s232, 1
      %s234 = scalar_select %p231, %s232, %s233
      %p237 = pneg %p231
      %p238 = scmp.eq.s32.totalorder %s33, 1
      %p239 = por %p237, %p238
      %p240 = scmp.ne.s32.totalorder %s232, %s235
      %p241 = scmp.eq.s32.totalorder %s33, 0
      %p242 = por %p240, %p241
      %p243 = scmp.ne.s32.totalorder %s232, %s235
      %p244 = scmp.eq.s32.totalorder %s38, 1
      %p245 = por %p243, %p244
      %p246 = scmp.ne.s32.totalorder %s235, %s236
      %p247 = scmp.eq.s32.totalorder %s38, 0
      %p248 = por %p246, %p247
      %p249 = scmp.ne.s32.totalorder %s235, %s236
      %p250 = scmp.eq.s32.totalorder %s39, 1
      %p251 = por %p249, %p250
      %p253 = scmp.ne.s32.totalorder %s236, %s252
      %p254 = scmp.eq.s32.totalorder %s39, 0
      %p255 = por %p253, %p254
      %s256 = ssub.s32 %s41, %s48
      %p257 = scmp.eq.s32.totalorder %s256, 0
      %s259 = sadd.s32 %s258, 1
      %s260 = scalar_select %p257, %s258, %s259
      %p263 = pneg %p257
      %p264 = scmp.eq.s32.totalorder %s33, 1
      %p265 = por %p263, %p264
      %p266 = scmp.ne.s32.totalorder %s258, %s261
      %p267 = scmp.eq.s32.totalorder %s33, 0
      %p268 = por %p266, %p267
      %p269 = scmp.ne.s32.totalorder %s258, %s261
      %p270 = scmp.eq.s32.totalorder %s38, 1
      %p271 = por %p269, %p270
      %p272 = scmp.ne.s32.totalorder %s261, %s262
      %p273 = scmp.eq.s32.totalorder %s38, 0
      %p274 = por %p272, %p273
      %p275 = scmp.ne.s32.totalorder %s261, %s262
      %p276 = scmp.eq.s32.totalorder %s39, 1
      %p277 = por %p275, %p276
      %p279 = scmp.ne.s32.totalorder %s262, %s278
      %p280 = scmp.eq.s32.totalorder %s39, 0
      %p281 = por %p279, %p280
      %s282 = ssub.s32 %s41, %s48
      %p283 = scmp.eq.s32.totalorder %s282, 0
      %s285 = sadd.s32 %s284, 1
      %s286 = scalar_select %p283, %s284, %s285
      %p289 = pneg %p283
      %p290 = scmp.eq.s32.totalorder %s33, 1
      %p291 = por %p289, %p290
      %p292 = scmp.ne.s32.totalorder %s284, %s287
      %p293 = scmp.eq.s32.totalorder %s33, 0
      %p294 = por %p292, %p293
      %p295 = scmp.ne.s32.totalorder %s284, %s287
      %p296 = scmp.eq.s32.totalorder %s38, 1
      %p297 = por %p295, %p296
      %p298 = scmp.ne.s32.totalorder %s287, %s288
      %p299 = scmp.eq.s32.totalorder %s38, 0
      %p300 = por %p298, %p299
      %p301 = scmp.ne.s32.totalorder %s287, %s288
      %p302 = scmp.eq.s32.totalorder %s39, 1
      %p303 = por %p301, %p302
      %p305 = scmp.ne.s32.totalorder %s288, %s304
      %p306 = scmp.eq.s32.totalorder %s39, 0
      %p307 = por %p305, %p306
      %s308 = ssub.s32 %s41, %s48
      %p309 = scmp.eq.s32.totalorder %s308, 0
      %s311 = sadd.s32 %s310, 1
      %s312 = scalar_select %p309, %s310, %s311
      %p315 = pneg %p309
      %p316 = scmp.eq.s32.totalorder %s33, 1
      %p317 = por %p315, %p316
      %p318 = scmp.ne.s32.totalorder %s310, %s313
      %p319 = scmp.eq.s32.totalorder %s33, 0
      %p320 = por %p318, %p319
      %p321 = scmp.ne.s32.totalorder %s310, %s313
      %p322 = scmp.eq.s32.totalorder %s38, 1
      %p323 = por %p321, %p322
      %p324 = scmp.ne.s32.totalorder %s313, %s314
      %p325 = scmp.eq.s32.totalorder %s38, 0
      %p326 = por %p324, %p325
      %p327 = scmp.ne.s32.totalorder %s313, %s314
      %p328 = scmp.eq.s32.totalorder %s39, 1
      %p329 = por %p327, %p328
      %p331 = scmp.ne.s32.totalorder %s314, %s330
      %p332 = scmp.eq.s32.totalorder %s39, 0
      %p333 = por %p331, %p332
      %s334 = ssub.s32 %s41, %s48
      %p335 = scmp.eq.s32.totalorder %s334, 0
      %s337 = sadd.s32 %s336, 1
      %s338 = scalar_select %p335, %s336, %s337
      %p341 = pneg %p335
      %p342 = scmp.eq.s32.totalorder %s33, 1
      %p343 = por %p341, %p342
      %p344 = scmp.ne.s32.totalorder %s336, %s339
      %p345 = scmp.eq.s32.totalorder %s33, 0
      %p346 = por %p344, %p345
      %p347 = scmp.ne.s32.totalorder %s336, %s339
      %p348 = scmp.eq.s32.totalorder %s38, 1
      %p349 = por %p347, %p348
      %p350 = scmp.ne.s32.totalorder %s339, %s340
      %p351 = scmp.eq.s32.totalorder %s38, 0
      %p352 = por %p350, %p351
      %p353 = scmp.ne.s32.totalorder %s339, %s340
      %p354 = scmp.eq.s32.totalorder %s39, 1
      %p355 = por %p353, %p354
      %p357 = scmp.ne.s32.totalorder %s340, %s356
      %p358 = scmp.eq.s32.totalorder %s39, 0
      %p359 = por %p357, %p358
      %s360 = ssub.s32 %s41, %s48
      %p361 = scmp.eq.s32.totalorder %s360, 0
      %s363 = sadd.s32 %s362, 1
      %s364 = scalar_select %p361, %s362, %s363
      %p367 = pneg %p361
      %p368 = scmp.eq.s32.totalorder %s33, 1
      %p369 = por %p367, %p368
      %p370 = scmp.ne.s32.totalorder %s362, %s365
      %p371 = scmp.eq.s32.totalorder %s33, 0
      %p372 = por %p370, %p371
      %p373 = scmp.ne.s32.totalorder %s362, %s365
      %p374 = scmp.eq.s32.totalorder %s38, 1
      %p375 = por %p373, %p374
      %p376 = scmp.ne.s32.totalorder %s365, %s366
      %p377 = scmp.eq.s32.totalorder %s38, 0
      %p378 = por %p376, %p377
      %p379 = scmp.ne.s32.totalorder %s365, %s366
      %p380 = scmp.eq.s32.totalorder %s39, 1
      %p381 = por %p379, %p380
      %p383 = scmp.ne.s32.totalorder %s366, %s382
      %p384 = scmp.eq.s32.totalorder %s39, 0
      %p385 = por %p383, %p384
      %s386 = ssub.s32 %s41, %s48
      %p387 = scmp.eq.s32.totalorder %s386, 0
      %s389 = sadd.s32 %s388, 1
      %s390 = scalar_select %p387, %s388, %s389
      %p393 = pneg %p387
      %p394 = scmp.eq.s32.totalorder %s33, 1
      %p395 = por %p393, %p394
      %p396 = scmp.ne.s32.totalorder %s388, %s391
      %p397 = scmp.eq.s32.totalorder %s33, 0
      %p398 = por %p396, %p397
      %p399 = scmp.ne.s32.totalorder %s388, %s391
      %p400 = scmp.eq.s32.totalorder %s38, 1
      %p401 = por %p399, %p400
      %p402 = scmp.ne.s32.totalorder %s391, %s392
      %p403 = scmp.eq.s32.totalorder %s38, 0
      %p404 = por %p402, %p403
      %p405 = scmp.ne.s32.totalorder %s391, %s392
      %p406 = scmp.eq.s32.totalorder %s39, 1
      %p407 = por %p405, %p406
      %p409 = scmp.ne.s32.totalorder %s392, %s408
      %p410 = scmp.eq.s32.totalorder %s39, 0
      %p411 = por %p409, %p410
      %s413 = sadd.s32 %s412, 1
      %p416 = scmp.eq.s32.totalorder %s33, 1
      %p417 = scmp.ne.s32.totalorder %s412, %s414
      %p418 = scmp.eq.s32.totalorder %s33, 0
      %p419 = por %p417, %p418
      %p420 = scmp.ne.s32.totalorder %s412, %s414
      %p421 = scmp.eq.s32.totalorder %s38, 1
      %p422 = por %p420, %p421
      %p423 = scmp.ne.s32.totalorder %s414, %s415
      %p424 = scmp.eq.s32.totalorder %s38, 0
      %p425 = por %p423, %p424
      %p426 = scmp.ne.s32.totalorder %s414, %s415
      %p427 = scmp.eq.s32.totalorder %s39, 1
      %p428 = por %p426, %p427
      %p430 = scmp.ne.s32.totalorder %s415, %s429
      %p431 = scmp.eq.s32.totalorder %s39, 0
      %p432 = por %p430, %p431
      %s434 = sadd.s32 %s433, 1
      %p437 = scmp.eq.s32.totalorder %s33, 1
      %p438 = scmp.ne.s32.totalorder %s433, %s435
      %p439 = scmp.eq.s32.totalorder %s33, 0
      %p440 = por %p438, %p439
      %p441 = scmp.ne.s32.totalorder %s433, %s435
      %p442 = scmp.eq.s32.totalorder %s38, 1
      %p443 = por %p441, %p442
      %p444 = scmp.ne.s32.totalorder %s435, %s436
      %p445 = scmp.eq.s32.totalorder %s38, 0
      %p446 = por %p444, %p445
      %p447 = scmp.ne.s32.totalorder %s435, %s436
      %p448 = scmp.eq.s32.totalorder %s39, 1
      %p449 = por %p447, %p448
      %p451 = scmp.ne.s32.totalorder %s436, %s450
      %p452 = scmp.eq.s32.totalorder %s39, 0
      %p453 = por %p451, %p452
      %s455 = sadd.s32 %s454, 1
      %p458 = scmp.eq.s32.totalorder %s33, 1
      %p459 = scmp.ne.s32.totalorder %s454, %s456
      %p460 = scmp.eq.s32.totalorder %s33, 0
      %p461 = por %p459, %p460
      %p462 = scmp.ne.s32.totalorder %s454, %s456
      %p463 = scmp.eq.s32.totalorder %s38, 1
      %p464 = por %p462, %p463
      %p465 = scmp.ne.s32.totalorder %s456, %s457
      %p466 = scmp.eq.s32.totalorder %s38, 0
      %p467 = por %p465, %p466
      %p468 = scmp.ne.s32.totalorder %s456, %s457
      %p469 = scmp.eq.s32.totalorder %s39, 1
      %p470 = por %p468, %p469
      %p472 = scmp.ne.s32.totalorder %s457, %s471
      %p473 = scmp.eq.s32.totalorder %s39, 0
      %p474 = por %p472, %p473
      %s475 = ssub.s32 %s40, %s52
      %p476 = scmp.eq.s32.totalorder %s475, 0
      %s478 = sadd.s32 %s477, 1
      %s479 = scalar_select %p476, %s477, %s478
      %p482 = pneg %p476
      %p483 = scmp.eq.s32.totalorder %s33, 1
      %p484 = por %p482, %p483
      %p485 = scmp.ne.s32.totalorder %s477, %s480
      %p486 = scmp.eq.s32.totalorder %s33, 0
      %p487 = por %p485, %p486
      %p488 = scmp.ne.s32.totalorder %s477, %s480
      %p489 = scmp.eq.s32.totalorder %s38, 1
      %p490 = por %p488, %p489
      %p491 = scmp.ne.s32.totalorder %s480, %s481
      %p492 = scmp.eq.s32.totalorder %s38, 0
      %p493 = por %p491, %p492
      %p494 = scmp.ne.s32.totalorder %s480, %s481
      %p495 = scmp.eq.s32.totalorder %s39, 1
      %p496 = por %p494, %p495
      %p498 = scmp.ne.s32.totalorder %s481, %s497
      %p499 = scmp.eq.s32.totalorder %s39, 0
      %p500 = por %p498, %p499
      %p501 = scmp.le.s32.totalorder 1, %s33
      %p502 = scmp.lt.s32.totalorder %s33, 3
      %p503 = pnand %p501, %p502
      %p504 = pneg %p503
      // Predicated region
      $region9: #{tpu_custom_call.1} parent=5 // pred_check
        _
      $region10: #{tpu_custom_call.1} parent=5 // pred_check_branch
        %506 = sbr.rel (%p503) target = $region12
      $region11: #{tpu_custom_call.1} parent=5 // pred_region
        %s507 = ssub.s32 %s33, 1
        // Predicated region
        $region13: #{tpu_custom_call.1} parent=11 // pred_check
          %p508 = pneg %p71
        $region14: #{tpu_custom_call.1} parent=11 // pred_check_branch
          %510 = sbr.rel (%p508) target = $region16
        $region15: #{tpu_custom_call.1} parent=11 // pred_region
          %s511 = smul.u32 2, %s42
          %p512 = scmp.lt.s32.totalorder %s511, 1
          %s513 = scalar_select %p512, %s511, 1
          %s514 = smul.addr %s513, 8
          %s515 = scalar_lea.vmem %s1, %s514
          %s516 = smul.u32 2, %s42
        $region16: #{tpu_custom_call.1} parent=11 // pred_fallthru
          _
        // Predicated region
        $region17: #{tpu_custom_call.1} parent=11 // pred_check
          %p517 = pneg %p92
        $region18: #{tpu_custom_call.1} parent=11 // pred_check_branch
          %519 = sbr.rel (%p517) target = $region20
        $region19: #{tpu_custom_call.1} parent=11 // pred_region
          _
        $region20: #{tpu_custom_call.1} parent=11 // pred_fallthru
          _
        // Predicated region
        $region21: #{tpu_custom_call.1} parent=11 // pred_check
          %p520 = pneg %p425
        $region22: #{tpu_custom_call.1} parent=11 // pred_check_branch
          %522 = sbr.rel (%p520) target = $region24
        $region23: #{tpu_custom_call.1} parent=11 // pred_region
          _
        $region24: #{tpu_custom_call.1} parent=11 // pred_fallthru
          _
        // Predicated region
        $region25: #{tpu_custom_call.1} parent=11 // pred_check
          %p523 = pneg %p446
        $region26: #{tpu_custom_call.1} parent=11 // pred_check_branch
          %525 = sbr.rel (%p523) target = $region28
        $region27: #{tpu_custom_call.1} parent=11 // pred_region
          _
        $region28: #{tpu_custom_call.1} parent=11 // pred_fallthru
          _
        // Predicated region
        $region29: #{tpu_custom_call.1} parent=11 // pred_check
          %p526 = pneg %p467
        $region30: #{tpu_custom_call.1} parent=11 // pred_check_branch
          %528 = sbr.rel (%p526) target = $region32
        $region31: #{tpu_custom_call.1} parent=11 // pred_region
          _
        $region32: #{tpu_custom_call.1} parent=11 // pred_fallthru
          _
      $region12: #{tpu_custom_call.1} parent=5 // pred_fallthru
        _
      %p529 = scmp.lt.s32.totalorder %s33, 2
      // Predicated region
      $region33: #{tpu_custom_call.1} parent=5 // pred_check
        %p530 = pneg %p529
      $region34: #{tpu_custom_call.1} parent=5 // pred_check_branch
        %532 = sbr.rel (%p530) target = $region36
      $region35: #{tpu_custom_call.1} parent=5 // pred_region
        // Predicated region
        $region37: #{tpu_custom_call.1} parent=35 // pred_check
          %p533 = pneg %p112
        $region38: #{tpu_custom_call.1} parent=35 // pred_check_branch
          %535 = sbr.rel (%p533) target = $region40
        $region39: #{tpu_custom_call.1} parent=35 // pred_region
          %p536 = scmp.lt.s32.totalorder %s41, 1
          %s537 = scalar_select %p536, %s41, 1
          %s538 = scalar_lea.vmem %s3, %s537
        $region40: #{tpu_custom_call.1} parent=35 // pred_fallthru
          _
        // Predicated region
        $region41: #{tpu_custom_call.1} parent=35 // pred_check
          %p539 = pneg %p138
        $region42: #{tpu_custom_call.1} parent=35 // pred_check_branch
          %541 = sbr.rel (%p539) target = $region44
        $region43: #{tpu_custom_call.1} parent=35 // pred_region
          %p542 = scmp.lt.s32.totalorder %s41, 1
          %s543 = scalar_select %p542, %s41, 1
          %s544 = scalar_lea.vmem %s4, %s543
        $region44: #{tpu_custom_call.1} parent=35 // pred_fallthru
          _
        // Predicated region
        $region45: #{tpu_custom_call.1} parent=35 // pred_check
          %p545 = pneg %p164
        $region46: #{tpu_custom_call.1} parent=35 // pred_check_branch
          %547 = sbr.rel (%p545) target = $region48
        $region47: #{tpu_custom_call.1} parent=35 // pred_region
          %p548 = scmp.lt.s32.totalorder %s41, 1
          %s549 = scalar_select %p548, %s41, 1
          %s550 = smul.addr %s549, 4
          %s551 = smul.addr %s550, 4
          %s552 = scalar_lea.vmem %s5, %s551
        $region48: #{tpu_custom_call.1} parent=35 // pred_fallthru
          _
        // Predicated region
        $region49: #{tpu_custom_call.1} parent=35 // pred_check
          %p553 = pneg %p190
        $region50: #{tpu_custom_call.1} parent=35 // pred_check_branch
          %555 = sbr.rel (%p553) target = $region52
        $region51: #{tpu_custom_call.1} parent=35 // pred_region
          %p556 = scmp.lt.s32.totalorder %s41, 1
          %s557 = scalar_select %p556, %s41, 1
          %s558 = scalar_lea.vmem %s6, %s557
        $region52: #{tpu_custom_call.1} parent=35 // pred_fallthru
          _
        // Predicated region
        $region53: #{tpu_custom_call.1} parent=35 // pred_check
          %p559 = pneg %p216
        $region54: #{tpu_custom_call.1} parent=35 // pred_check_branch
          %561 = sbr.rel (%p559) target = $region56
        $region55: #{tpu_custom_call.1} parent=35 // pred_region
          %p562 = scmp.lt.s32.totalorder %s41, 1
          %s563 = scalar_select %p562, %s41, 1
          %s564 = smul.addr %s563, 4
          %s565 = smul.addr %s564, 4
          %s566 = scalar_lea.vmem %s7, %s565
        $region56: #{tpu_custom_call.1} parent=35 // pred_fallthru
          _
        // Predicated region
        $region57: #{tpu_custom_call.1} parent=35 // pred_check
          %p567 = pneg %p242
        $region58: #{tpu_custom_call.1} parent=35 // pred_check_branch
          %569 = sbr.rel (%p567) target = $region60
        $region59: #{tpu_custom_call.1} parent=35 // pred_region
          %p570 = scmp.lt.s32.totalorder %s41, 1
          %s571 = scalar_select %p570, %s41, 1
          %s572 = scalar_lea.vmem %s8, %s571
        $region60: #{tpu_custom_call.1} parent=35 // pred_fallthru
          _
        // Predicated region
        $region61: #{tpu_custom_call.1} parent=35 // pred_check
          %p573 = pneg %p268
        $region62: #{tpu_custom_call.1} parent=35 // pred_check_branch
          %575 = sbr.rel (%p573) target = $region64
        $region63: #{tpu_custom_call.1} parent=35 // pred_region
          %p576 = scmp.lt.s32.totalorder %s41, 1
          %s577 = scalar_select %p576, %s41, 1
          %s578 = scalar_lea.vmem %s9, %s577
        $region64: #{tpu_custom_call.1} parent=35 // pred_fallthru
          _
        // Predicated region
        $region65: #{tpu_custom_call.1} parent=35 // pred_check
          %p579 = pneg %p294
        $region66: #{tpu_custom_call.1} parent=35 // pred_check_branch
          %581 = sbr.rel (%p579) target = $region68
        $region67: #{tpu_custom_call.1} parent=35 // pred_region
          %p582 = scmp.lt.s32.totalorder %s41, 1
          %s583 = scalar_select %p582, %s41, 1
          %s584 = scalar_lea.vmem %s10, %s583
        $region68: #{tpu_custom_call.1} parent=35 // pred_fallthru
          _
        // Predicated region
        $region69: #{tpu_custom_call.1} parent=35 // pred_check
          %p585 = pneg %p320
        $region70: #{tpu_custom_call.1} parent=35 // pred_check_branch
          %587 = sbr.rel (%p585) target = $region72
        $region71: #{tpu_custom_call.1} parent=35 // pred_region
          %p588 = scmp.lt.s32.totalorder %s41, 1
          %s589 = scalar_select %p588, %s41, 1
          %s590 = smul.addr %s589, 4
          %s591 = smul.addr %s590, 4
          %s592 = scalar_lea.vmem %s11, %s591
        $region72: #{tpu_custom_call.1} parent=35 // pred_fallthru
          _
        // Predicated region
        $region73: #{tpu_custom_call.1} parent=35 // pred_check
          %p593 = pneg %p346
        $region74: #{tpu_custom_call.1} parent=35 // pred_check_branch
          %595 = sbr.rel (%p593) target = $region76
        $region75: #{tpu_custom_call.1} parent=35 // pred_region
          %p596 = scmp.lt.s32.totalorder %s41, 1
          %s597 = scalar_select %p596, %s41, 1
          %s598 = scalar_lea.vmem %s12, %s597
        $region76: #{tpu_custom_call.1} parent=35 // pred_fallthru
          _
        // Predicated region
        $region77: #{tpu_custom_call.1} parent=35 // pred_check
          %p599 = pneg %p372
        $region78: #{tpu_custom_call.1} parent=35 // pred_check_branch
          %601 = sbr.rel (%p599) target = $region80
        $region79: #{tpu_custom_call.1} parent=35 // pred_region
          %p602 = scmp.lt.s32.totalorder %s41, 1
          %s603 = scalar_select %p602, %s41, 1
          %s604 = smul.addr %s603, 16
          %s605 = smul.addr %s604, 4
          %s606 = scalar_lea.vmem %s13, %s605
        $region80: #{tpu_custom_call.1} parent=35 // pred_fallthru
          _
        // Predicated region
        $region81: #{tpu_custom_call.1} parent=35 // pred_check
          %p607 = pneg %p398
        $region82: #{tpu_custom_call.1} parent=35 // pred_check_branch
          %609 = sbr.rel (%p607) target = $region84
        $region83: #{tpu_custom_call.1} parent=35 // pred_region
          %p610 = scmp.lt.s32.totalorder %s41, 1
          %s611 = scalar_select %p610, %s41, 1
          %s612 = scalar_lea.vmem %s14, %s611
        $region84: #{tpu_custom_call.1} parent=35 // pred_fallthru
          _
      $region36: #{tpu_custom_call.1} parent=5 // pred_fallthru
        _
      %p613 = scmp.le.s32.totalorder 1, %s33
      %p614 = scmp.lt.s32.totalorder %s33, 3
      %p615 = pnand %p613, %p614
      %p616 = pneg %p615
      // Predicated region
      $region85: #{tpu_custom_call.1} parent=5 // pred_check
        _
      $region86: #{tpu_custom_call.1} parent=5 // pred_check_branch
        %618 = sbr.rel (%p615) target = $region88
      $region87: #{tpu_custom_call.1} parent=5 // pred_region
        %s619 = ssub.s32 %s33, 1
        %s620 = smul.u32 2, %s42
        %p621 = scmp.lt.s32.totalorder %s620, 1
        %s622 = scalar_select %p621, %s620, 1
        %s623 = smul.addr %s622, 8
        %s624 = scalar_lea.vmem %s1, %s623
        %p625 = pneg %p71
        %p626 = pneg %p68
        %p627 = pneg %p92
        %p628 = pneg %p89
        %p629 = scmp.lt.s32.totalorder %s43, 1
        %s630 = scalar_select %p629, %s43, 1
        %s631 = scalar_lea.vmem %s3, %s630
        %p632 = pneg %p118
        %p633 = pneg %p115
        %p634 = scmp.lt.s32.totalorder %s43, 1
        %s635 = scalar_select %p634, %s43, 1
        %s636 = scalar_lea.vmem %s4, %s635
        %p637 = pneg %p144
        %p638 = pneg %p141
        %p639 = scmp.lt.s32.totalorder %s43, 1
        %s640 = scalar_select %p639, %s43, 1
        %s641 = smul.addr %s640, 4
        %s642 = smul.addr %s641, 4
        %s643 = scalar_lea.vmem %s5, %s642
        %p644 = pneg %p170
        %p645 = pneg %p167
        %p646 = scmp.lt.s32.totalorder %s43, 1
        %s647 = scalar_select %p646, %s43, 1
        %s648 = scalar_lea.vmem %s6, %s647
        %p649 = pneg %p196
        %p650 = pneg %p193
        %p651 = scmp.lt.s32.totalorder %s43, 1
        %s652 = scalar_select %p651, %s43, 1
        %s653 = smul.addr %s652, 4
        %s654 = smul.addr %s653, 4
        %s655 = scalar_lea.vmem %s7, %s654
        %p656 = pneg %p222
        %p657 = pneg %p219
        %p658 = scmp.lt.s32.totalorder %s43, 1
        %s659 = scalar_select %p658, %s43, 1
        %s660 = scalar_lea.vmem %s8, %s659
        %p661 = pneg %p248
        %p662 = pneg %p245
        %p663 = scmp.lt.s32.totalorder %s43, 1
        %s664 = scalar_select %p663, %s43, 1
        %s665 = scalar_lea.vmem %s9, %s664
        %p666 = pneg %p274
        %p667 = pneg %p271
        %p668 = scmp.lt.s32.totalorder %s43, 1
        %s669 = scalar_select %p668, %s43, 1
        %s670 = scalar_lea.vmem %s10, %s669
        %p671 = pneg %p300
        %p672 = pneg %p297
        %p673 = scmp.lt.s32.totalorder %s43, 1
        %s674 = scalar_select %p673, %s43, 1
        %s675 = smul.addr %s674, 4
        %s676 = smul.addr %s675, 4
        %s677 = scalar_lea.vmem %s11, %s676
        %p678 = pneg %p326
        %p679 = pneg %p323
        %p680 = scmp.lt.s32.totalorder %s43, 1
        %s681 = scalar_select %p680, %s43, 1
        %s682 = scalar_lea.vmem %s12, %s681
        %p683 = pneg %p352
        %p684 = pneg %p349
        %p685 = scmp.lt.s32.totalorder %s43, 1
        %s686 = scalar_select %p685, %s43, 1
        %s687 = smul.addr %s686, 16
        %s688 = smul.addr %s687, 4
        %s689 = scalar_lea.vmem %s13, %s688
        %p690 = pneg %p378
        %p691 = pneg %p375
        %p692 = scmp.lt.s32.totalorder %s43, 1
        %s693 = scalar_select %p692, %s43, 1
        %s694 = scalar_lea.vmem %s14, %s693
        %p695 = pneg %p404
        %p696 = pneg %p401
        %p697 = pneg %p425
        %p698 = pneg %p422
        %p699 = pneg %p446
        %p700 = pneg %p443
        %p701 = pneg %p467
        %p702 = pneg %p464
        %p703 = pneg %p493
        %p704 = pneg %p490
        %s705 = smul.u32 2, %s42
        %p706 = scmp.lt.s32.totalorder %s705, 1
        %s707 = scalar_select %p706, %s705, 1
        %s708 = smul.addr %s707, 8
        %s709 = scalar_lea.vmem %s1, %s708
        %s710 = smul.u32 2, %s42
        %p711 = scmp.lt.s32.totalorder %s43, 1
        %s712 = scalar_select %p711, %s43, 1
        %s713 = scalar_lea.vmem %s3, %s712
        %p714 = scmp.lt.s32.totalorder %s43, 1
        %s715 = scalar_select %p714, %s43, 1
        %s716 = scalar_lea.vmem %s4, %s715
        %p717 = scmp.lt.s32.totalorder %s43, 1
        %s718 = scalar_select %p717, %s43, 1
        %s719 = smul.addr %s718, 4
        %s720 = smul.addr %s719, 4
        %s721 = scalar_lea.vmem %s5, %s720
        %p722 = scmp.lt.s32.totalorder %s43, 1
        %s723 = scalar_select %p722, %s43, 1
        %s724 = scalar_lea.vmem %s6, %s723
        %p725 = scmp.lt.s32.totalorder %s43, 1
        %s726 = scalar_select %p725, %s43, 1
        %s727 = smul.addr %s726, 4
        %s728 = smul.addr %s727, 4
        %s729 = scalar_lea.vmem %s7, %s728
        %p730 = scmp.lt.s32.totalorder %s43, 1
        %s731 = scalar_select %p730, %s43, 1
        %s732 = scalar_lea.vmem %s8, %s731
        %p733 = scmp.lt.s32.totalorder %s43, 1
        %s734 = scalar_select %p733, %s43, 1
        %s735 = scalar_lea.vmem %s9, %s734
        %p736 = scmp.lt.s32.totalorder %s43, 1
        %s737 = scalar_select %p736, %s43, 1
        %s738 = scalar_lea.vmem %s10, %s737
        %p739 = scmp.lt.s32.totalorder %s43, 1
        %s740 = scalar_select %p739, %s43, 1
        %s741 = smul.addr %s740, 4
        %s742 = smul.addr %s741, 4
        %s743 = scalar_lea.vmem %s11, %s742
        %p744 = scmp.lt.s32.totalorder %s43, 1
        %s745 = scalar_select %p744, %s43, 1
        %s746 = scalar_lea.vmem %s12, %s745
        %p747 = scmp.lt.s32.totalorder %s43, 1
        %s748 = scalar_select %p747, %s43, 1
        %s749 = smul.addr %s748, 16
        %s750 = smul.addr %s749, 4
        %s751 = scalar_lea.vmem %s13, %s750
        %p752 = scmp.lt.s32.totalorder %s43, 1
        %s753 = scalar_select %p752, %s43, 1
        %s754 = scalar_lea.vmem %s14, %s753
        %s757 = smul.u32 %s42, 2
        %p758 = scmp.eq.s32.totalorder %s43, 0
        // Predicated region
        $region89: #{tpu_custom_call.1} parent=87 // pred_check
          %p759 = pneg %p758
        $region90: #{tpu_custom_call.1} parent=87 // pred_check_branch
          %761 = sbr.rel (%p759) target = $region92
        $region91: #{tpu_custom_call.1} parent=87 // pred_region
          %v762 = vld [vmem:[%s709] sm:$0xff]
          %v763 = vld [vmem:[%s709 + $0x8] sm:$0xff]
          %v764 = vld [vmem:[%s2] sm:$0xff]
          %v765 = vadd.f32 %v762, %v764
          %v766 = vadd.f32 %v763, %v764
          %vm767 = vcmask 261120
          %768 = vst.msk [vmem:[#allocation2] sm:$0xff] %vm767, %v765
          %769 = vst.msk [vmem:[#allocation2 + $0x8] sm:$0xff] %vm767, %v766
        $region92: #{tpu_custom_call.1} parent=87 // pred_fallthru
          _
        %v770 = vld [vmem:[#allocation2] sm:$0xff]
        %v771 = vld [vmem:[#allocation2 + $0x8] sm:$0xff]
        %v772 = vld [vmem:[%s713] sm:$0x1]
        %v773 = vld [vmem:[%s716] sm:$0x1]
        %vm774 = vcmask 261120
        %v775 = vsel %vm774, %v770, 0.0
        %776 = vadd.xlane.f32.xlu0 %v775
        %v777 = vpop.xlane.xlu0 %776
        %v778 = vsel %vm774, %v771, 0.0
        %779 = vadd.xlane.f32.xlu0 %v778
        %v780 = vpop.xlane.xlu0 %779
        %v781 = vrcp.pop 32.0
        %v782 = vmul.f32 32.0, %v781
        %v783 = vsub.f32 1.0, %v782
        %v784 = vmul.f32 %v781, %v783
        %v785 = vadd.f32 %v781, %v784
        %vm786 = vweird.f32 %v781
        %v787 = vsel %vm786, %v781, %v785
        %v788 = vmul.f32 %v777, %v787
        %v789 = vmul.f32 %v780, %v787
        %v790 = vsub.f32 %v770, %v788
        %v791 = vsub.f32 %v771, %v789
        %v792 = vmul.f32 %v790, %v790
        %v793 = vmul.f32 %v791, %v791
        %v794 = vsel %vm774, %v792, 0.0
        %795 = vadd.xlane.f32.xlu0 %v794
        %v796 = vpop.xlane.xlu0 %795
        %v797 = vsel %vm774, %v793, 0.0
        %798 = vadd.xlane.f32.xlu0 %v797
        %v799 = vpop.xlane.xlu0 %798
        %v800 = vmul.f32 %v796, %v787
        %v801 = vmul.f32 %v799, %v787
        %v802 = vadd.f32 %v800, 1e-05
        %v803 = vadd.f32 %v801, 1e-05
        %v804 = vrsqrt.pop %v802
        %v805 = vmul.f32 %v804, %v802
        %v806 = vmul.f32 %v805, %v804
        %v807 = vmul.f32 0.5, %v806
        %v808 = vsub.f32 1.5, %v807
        %v809 = vmul.f32 %v804, %v808
        %vm810 = vweird.f32 %v802
        %vm811 = vweird.f32 %v804
        %vm812 = vmor %vm810, %vm811
        %v813 = vsel %vm812, %v804, %v809
        %v814 = vrsqrt.pop %v803
        %v815 = vmul.f32 %v814, %v803
        %v816 = vmul.f32 %v815, %v814
        %v817 = vmul.f32 0.5, %v816
        %v818 = vsub.f32 1.5, %v817
        %v819 = vmul.f32 %v814, %v818
        %vm820 = vweird.f32 %v803
        %vm821 = vweird.f32 %v814
        %vm822 = vmor %vm820, %vm821
        %v823 = vsel %vm822, %v814, %v819
        %v824 = vmul.f32 %v790, %v813
        %v825 = vmul.f32 %v791, %v823
        %v827 = vperm.slane %v772, 0
        %v829 = vmul.f32 %v824, %v827
        %v830 = vmul.f32 %v825, %v827
        %v832 = vperm.slane %v773, 0
        %v834 = vadd.f32 %v829, %v832
        %v835 = vadd.f32 %v830, %v832
        %v836 = vld [vmem:[%s721] sm:$0xf]
        %v837 = vld [vmem:[%s721 + $0x4] sm:$0xf]
        %v838 = vld [vmem:[%s721 + $0x8] sm:$0xf]
        %v839 = vld [vmem:[%s721 + $0xc] sm:$0xf]
        %v840 = vpack.c.bf16 %v835, %v834
        %v841 = vld [vmem:[%s724] sm:$0x1]
        %v843 = vperm.slane %v841, 0
        %v849 = vunpack.c.l.b16 %v836
        %v850 = vunpack.c.l.b16 %v837
        %v851 = vunpack.c.l.b16 %v838
        %v852 = vunpack.c.l.b16 %v839
        %v853 = vpack.c.b16 %v850, %v849
        %v854 = vpack.c.b16 %v852, %v851
        %v858 = vsel %vm774, %v840, 0
        %860 = vmatpush.bf16.msra.mxu0 0
        %861 = vmatpush.bf16.msra.mxu0 0
        %862 = vmatpush.bf16.msra.mxu0 0
        %863 = vmatpush.bf16.msra.mxu0 0
        %864 = vmatpush.bf16.msra.mxu0 0
        %865 = vmatpush.bf16.msra.mxu0 0
        %866 = vmatpush.bf16.msra.mxu0 %v854
        %867 = vmatpush.bf16.msra.mxu0 %v853
        %868 = vmatmul.bf16.gmra.mxu0 %v858
        %v869 = vpop.f32.mrf.mxu0
        %v870 = vadd.f32 %v843, %v869
        %v871 = vpop.f32.mrf.mxu0
        %v872 = vadd.f32 %v843, %v871
        %873 = vdwg.mxu0
        %v874 = vmul.f32 %v870, 0.35355338
        %v875 = vmul.f32 %v872, 0.35355338
        %v876 = vpack.c.bf16 %v874, %v874
        %v877 = vpack.c.bf16 %v875, %v875
        %v878 = vpack.c.bf16 %v870, %v870
        %v879 = vpack.c.bf16 %v872, %v872
        %v880 = vlaneseq
        %v881 = vshrl.u32 %v880, 7
        %v882 = vlaneseq
        %v883 = vand.u32 %v882, 127
        %vm884 = vcmp.le.s32.totalorder %v883, %v881
        %v886 = vunpack.c.l.b16 %v878
        %v887 = vpack.c.b16 %v886, %v886
        %888 = vrot.lane.b32.xlu0 %v887, 96
        %v889 = vpop.permute.xlu0 %888
        %vm890 = vcmask 64512
        %v892 = vsel %vm890, %v876, 0
        %v895 = vsel %vm890, %v889, 0
        %897 = vmatpush.bf16.xpose.msra.mxu0 0
        %898 = vmatpush.bf16.xpose.msra.mxu0 0
        %899 = vmatpush.bf16.xpose.msra.mxu0 0
        %900 = vmatpush.bf16.xpose.msra.mxu0 0
        %901 = vmatpush.bf16.xpose.msra.mxu0 0
        %902 = vmatpush.bf16.xpose.msra.mxu0 0
        %903 = vmatpush.bf16.xpose.msra.mxu0 0
        %904 = vmatpush.bf16.xpose.msra.mxu0 %v895
        %905 = vmatmul.bf16.gmra.mxu0 %v892
        %v906 = vpop.f32.mrf.mxu0
        %v907 = vadd.f32 0.0, %v906
        %v908 = vpop.f32.mrf.mxu0
        %909 = vdwg.mxu0
        %v911 = vunpack.c.l.b16 %v879
        %v912 = vpack.c.b16 %v911, %v911
        %913 = vrot.lane.b32.xlu0 %v912, 96
        %v914 = vpop.permute.xlu0 %913
        %v916 = vsel %vm890, %v877, 0
        %v919 = vsel %vm890, %v914, 0
        %921 = vmatpush.bf16.xpose.msra.mxu0 0
        %922 = vmatpush.bf16.xpose.msra.mxu0 0
        %923 = vmatpush.bf16.xpose.msra.mxu0 0
        %924 = vmatpush.bf16.xpose.msra.mxu0 0
        %925 = vmatpush.bf16.xpose.msra.mxu0 0
        %926 = vmatpush.bf16.xpose.msra.mxu0 0
        %927 = vmatpush.bf16.xpose.msra.mxu0 0
        %928 = vmatpush.bf16.xpose.msra.mxu0 %v919
        %929 = vmatmul.bf16.gmra.mxu0 %v916
        %v930 = vpop.f32.mrf.mxu0
        %v931 = vadd.f32 0.0, %v930
        %v932 = vpop.f32.mrf.mxu0
        %933 = vdwg.mxu0
        %v934 = vsel %vm884, 1, 0
        %vm935 = vcmp.eq.s32.totalorder %v934, 1
        %v936 = vsel %vm935, %v907, -1e+30
        %v937 = vsel %vm935, %v931, -1e+30
        %v938 = vsel %vm890, %v936, -inf
        %939 = vmax.xlane.f32.xlu0 %v938
        %v940 = vpop.xlane.xlu0 %939
        %v941 = vsel %vm890, %v937, -inf
        %942 = vmax.xlane.f32.xlu0 %v941
        %v943 = vpop.xlane.xlu0 %942
        %v944 = vsub.f32 %v936, %v940
        %v945 = vsub.f32 %v937, %v943
        %v946 = vmul.f32 %v944, 1.442695
        %v947 = vpow.pop %v946
        %v948 = vmul.f32 %v945, 1.442695
        %v949 = vpow.pop %v948
        %v950 = vsel %vm890, %v947, 0.0
        %951 = vadd.xlane.f32.xlu0 %v950
        %v952 = vpop.xlane.xlu0 %951
        %v953 = vsel %vm890, %v949, 0.0
        %954 = vadd.xlane.f32.xlu0 %v953
        %v955 = vpop.xlane.xlu0 %954
        %v956 = vrcp.pop %v952
        %v957 = vrcp.pop %v955
        %v958 = vmul.f32 %v947, %v956
        %v959 = vmul.f32 %v949, %v957
        %v960 = vpack.c.bf16 %v958, %v958
        %v961 = vpack.c.bf16 %v959, %v959
        %962 = vrot.lane.b32.xlu0 %v887, 64
        %v963 = vpop.permute.xlu0 %962
        %v965 = vsel %vm890, %v960, 0
        %vm967 = vcmask 1043456
        %v969 = vsel %vm967, %v963, 0
        %971 = vmatpush.bf16.msra.mxu0 0
        %972 = vmatpush.bf16.msra.mxu0 0
        %973 = vmatpush.bf16.msra.mxu0 0
        %974 = vmatpush.bf16.msra.mxu0 0
        %975 = vmatpush.bf16.msra.mxu0 0
        %976 = vmatpush.bf16.msra.mxu0 0
        %977 = vmatpush.bf16.msra.mxu0 0
        %978 = vmatpush.bf16.msra.mxu0 %v969
        %979 = vmatmul.bf16.gmra.mxu0 %v965
        %v980 = vpop.f32.mrf.mxu0
        %v981 = vadd.f32 0.0, %v980
        %v982 = vpop.f32.mrf.mxu0
        %983 = vdwg.mxu0
        %984 = vrot.lane.b32.xlu0 %v912, 64
        %v985 = vpop.permute.xlu0 %984
        %v987 = vsel %vm890, %v961, 0
        %v990 = vsel %vm967, %v985, 0
        %992 = vmatpush.bf16.msra.mxu0 0
        %993 = vmatpush.bf16.msra.mxu0 0
        %994 = vmatpush.bf16.msra.mxu0 0
        %995 = vmatpush.bf16.msra.mxu0 0
        %996 = vmatpush.bf16.msra.mxu0 0
        %997 = vmatpush.bf16.msra.mxu0 0
        %998 = vmatpush.bf16.msra.mxu0 0
        %999 = vmatpush.bf16.msra.mxu0 %v990
        %1000 = vmatmul.bf16.gmra.mxu0 %v987
        %v1001 = vpop.f32.mrf.mxu0
        %v1002 = vadd.f32 0.0, %v1001
        %v1003 = vpop.f32.mrf.mxu0
        %1004 = vdwg.mxu0
        %v1005 = vpack.c.bf16 %v981, %v981
        %v1006 = vpack.c.bf16 %v1002, %v1002
        %vm1007 = vcmask 60416
        %1008 = vst.msk [vmem:[#allocation3] sm:$0xf] %vm1007, %v1005
        %1009 = vst.msk [vmem:[#allocation3 + $0x4] sm:$0xf] %vm1007, %v1006
        %v1011 = vunpack.c.l.b16 %v876
        %v1012 = vpack.c.b16 %v1011, %v1011
        %1013 = vrot.lane.b32.xlu0 %v1012, 120
        %v1014 = vpop.permute.xlu0 %1013
        %1015 = vrot.lane.b32.xlu0 %v887, 88
        %v1016 = vpop.permute.xlu0 %1015
        %v1018 = vsel %vm890, %v1014, 0
        %v1021 = vsel %vm890, %v1016, 0
        %1023 = vmatpush.bf16.xpose.msra.mxu0 0
        %1024 = vmatpush.bf16.xpose.msra.mxu0 0
        %1025 = vmatpush.bf16.xpose.msra.mxu0 0
        %1026 = vmatpush.bf16.xpose.msra.mxu0 0
        %1027 = vmatpush.bf16.xpose.msra.mxu0 0
        %1028 = vmatpush.bf16.xpose.msra.mxu0 0
        %1029 = vmatpush.bf16.xpose.msra.mxu0 0
        %1030 = vmatpush.bf16.xpose.msra.mxu0 %v1021
        %1031 = vmatmul.bf16.gmra.mxu0 %v1018
        %v1032 = vpop.f32.mrf.mxu0
        %v1033 = vadd.f32 0.0, %v1032
        %v1034 = vpop.f32.mrf.mxu0
        %1035 = vdwg.mxu0
        %v1037 = vunpack.c.l.b16 %v877
        %v1038 = vpack.c.b16 %v1037, %v1037
        %1039 = vrot.lane.b32.xlu0 %v1038, 120
        %v1040 = vpop.permute.xlu0 %1039
        %1041 = vrot.lane.b32.xlu0 %v912, 88
        %v1042 = vpop.permute.xlu0 %1041
        %v1044 = vsel %vm890, %v1040, 0
        %v1047 = vsel %vm890, %v1042, 0
        %1049 = vmatpush.bf16.xpose.msra.mxu0 0
        %1050 = vmatpush.bf16.xpose.msra.mxu0 0
        %1051 = vmatpush.bf16.xpose.msra.mxu0 0
        %1052 = vmatpush.bf16.xpose.msra.mxu0 0
        %1053 = vmatpush.bf16.xpose.msra.mxu0 0
        %1054 = vmatpush.bf16.xpose.msra.mxu0 0
        %1055 = vmatpush.bf16.xpose.msra.mxu0 0
        %1056 = vmatpush.bf16.xpose.msra.mxu0 %v1047
        %1057 = vmatmul.bf16.gmra.mxu0 %v1044
        %v1058 = vpop.f32.mrf.mxu0
        %v1059 = vadd.f32 0.0, %v1058
        %v1060 = vpop.f32.mrf.mxu0
        %1061 = vdwg.mxu0
        %v1062 = vsel %vm935, %v1033, -1e+30
        %v1063 = vsel %vm935, %v1059, -1e+30
        %v1064 = vsel %vm890, %v1062, -inf
        %1065 = vmax.xlane.f32.xlu0 %v1064
        %v1066 = vpop.xlane.xlu0 %1065
        %v1067 = vsel %vm890, %v1063, -inf
        %1068 = vmax.xlane.f32.xlu0 %v1067
        %v1069 = vpop.xlane.xlu0 %1068
        %v1070 = vsub.f32 %v1062, %v1066
        %v1071 = vsub.f32 %v1063, %v1069
        %v1072 = vmul.f32 %v1070, 1.442695
        %v1073 = vpow.pop %v1072
        %v1074 = vmul.f32 %v1071, 1.442695
        %v1075 = vpow.pop %v1074
        %v1076 = vsel %vm890, %v1073, 0.0
        %1077 = vadd.xlane.f32.xlu0 %v1076
        %v1078 = vpop.xlane.xlu0 %1077
        %v1079 = vsel %vm890, %v1075, 0.0
        %1080 = vadd.xlane.f32.xlu0 %v1079
        %v1081 = vpop.xlane.xlu0 %1080
        %v1082 = vrcp.pop %v1078
        %v1083 = vrcp.pop %v1081
        %v1084 = vmul.f32 %v1073, %v1082
        %v1085 = vmul.f32 %v1075, %v1083
        %v1086 = vpack.c.bf16 %v1084, %v1084
        %v1087 = vpack.c.bf16 %v1085, %v1085
        %1088 = vrot.lane.b32.xlu0 %v887, 56
        %v1089 = vpop.permute.xlu0 %1088
        %v1091 = vsel %vm890, %v1086, 0
        %v1094 = vsel %vm967, %v1089, 0
        %1096 = vmatpush.bf16.msra.mxu0 0
        %1097 = vmatpush.bf16.msra.mxu0 0
        %1098 = vmatpush.bf16.msra.mxu0 0
        %1099 = vmatpush.bf16.msra.mxu0 0
        %1100 = vmatpush.bf16.msra.mxu0 0
        %1101 = vmatpush.bf16.msra.mxu0 0
        %1102 = vmatpush.bf16.msra.mxu0 0
        %1103 = vmatpush.bf16.msra.mxu0 %v1094
        %1104 = vmatmul.bf16.gmra.mxu0 %v1091
        %v1105 = vpop.f32.mrf.mxu0
        %v1106 = vadd.f32 0.0, %v1105
        %v1107 = vpop.f32.mrf.mxu0
        %1108 = vdwg.mxu0
        %1109 = vrot.lane.b32.xlu0 %v912, 56
        %v1110 = vpop.permute.xlu0 %1109
        %v1112 = vsel %vm890, %v1087, 0
        %v1115 = vsel %vm967, %v1110, 0
        %1117 = vmatpush.bf16.msra.mxu0 0
        %1118 = vmatpush.bf16.msra.mxu0 0
        %1119 = vmatpush.bf16.msra.mxu0 0
        %1120 = vmatpush.bf16.msra.mxu0 0
        %1121 = vmatpush.bf16.msra.mxu0 0
        %1122 = vmatpush.bf16.msra.mxu0 0
        %1123 = vmatpush.bf16.msra.mxu0 0
        %1124 = vmatpush.bf16.msra.mxu0 %v1115
        %1125 = vmatmul.bf16.gmra.mxu0 %v1112
        %v1126 = vpop.f32.mrf.mxu0
        %v1127 = vadd.f32 0.0, %v1126
        %v1128 = vpop.f32.mrf.mxu0
        %1129 = vdwg.mxu0
        %v1130 = vpack.c.bf16 %v1106, %v1106
        %v1131 = vpack.c.bf16 %v1127, %v1127
        %1134 = vrot.lane.b32.xlu0 %v1130, 8
        %v1135 = vpop.permute.xlu0 %1134
        %1136 = vrot.lane.b32.xlu0 %v1131, 8
        %v1137 = vpop.permute.xlu0 %1136
        %vm1140 = vcmask 126016
        %1141 = vst.msk [vmem:[#allocation3] sm:$0xf] %vm1140, %v1135
        %1142 = vst.msk [vmem:[#allocation3 + $0x4] sm:$0xf] %vm1140, %v1137
        %1143 = vrot.lane.b32.xlu0 %v1012, 112
        %v1144 = vpop.permute.xlu0 %1143
        %1145 = vrot.lane.b32.xlu0 %v887, 80
        %v1146 = vpop.permute.xlu0 %1145
        %v1148 = vsel %vm890, %v1144, 0
        %v1151 = vsel %vm890, %v1146, 0
        %1153 = vmatpush.bf16.xpose.msra.mxu0 0
        %1154 = vmatpush.bf16.xpose.msra.mxu0 0
        %1155 = vmatpush.bf16.xpose.msra.mxu0 0
        %1156 = vmatpush.bf16.xpose.msra.mxu0 0
        %1157 = vmatpush.bf16.xpose.msra.mxu0 0
        %1158 = vmatpush.bf16.xpose.msra.mxu0 0
        %1159 = vmatpush.bf16.xpose.msra.mxu0 0
        %1160 = vmatpush.bf16.xpose.msra.mxu0 %v1151
        %1161 = vmatmul.bf16.gmra.mxu0 %v1148
        %v1162 = vpop.f32.mrf.mxu0
        %v1163 = vadd.f32 0.0, %v1162
        %v1164 = vpop.f32.mrf.mxu0
        %1165 = vdwg.mxu0
        %1166 = vrot.lane.b32.xlu0 %v1038, 112
        %v1167 = vpop.permute.xlu0 %1166
        %1168 = vrot.lane.b32.xlu0 %v912, 80
        %v1169 = vpop.permute.xlu0 %1168
        %v1171 = vsel %vm890, %v1167, 0
        %v1174 = vsel %vm890, %v1169, 0
        %1176 = vmatpush.bf16.xpose.msra.mxu0 0
        %1177 = vmatpush.bf16.xpose.msra.mxu0 0
        %1178 = vmatpush.bf16.xpose.msra.mxu0 0
        %1179 = vmatpush.bf16.xpose.msra.mxu0 0
        %1180 = vmatpush.bf16.xpose.msra.mxu0 0
        %1181 = vmatpush.bf16.xpose.msra.mxu0 0
        %1182 = vmatpush.bf16.xpose.msra.mxu0 0
        %1183 = vmatpush.bf16.xpose.msra.mxu0 %v1174
        %1184 = vmatmul.bf16.gmra.mxu0 %v1171
        %v1185 = vpop.f32.mrf.mxu0
        %v1186 = vadd.f32 0.0, %v1185
        %v1187 = vpop.f32.mrf.mxu0
        %1188 = vdwg.mxu0
        %v1189 = vsel %vm935, %v1163, -1e+30
        %v1190 = vsel %vm935, %v1186, -1e+30
        %v1191 = vsel %vm890, %v1189, -inf
        %1192 = vmax.xlane.f32.xlu0 %v1191
        %v1193 = vpop.xlane.xlu0 %1192
        %v1194 = vsel %vm890, %v1190, -inf
        %1195 = vmax.xlane.f32.xlu0 %v1194
        %v1196 = vpop.xlane.xlu0 %1195
        %v1197 = vsub.f32 %v1189, %v1193
        %v1198 = vsub.f32 %v1190, %v1196
        %v1199 = vmul.f32 %v1197, 1.442695
        %v1200 = vpow.pop %v1199
        %v1201 = vmul.f32 %v1198, 1.442695
        %v1202 = vpow.pop %v1201
        %v1203 = vsel %vm890, %v1200, 0.0
        %1204 = vadd.xlane.f32.xlu0 %v1203
        %v1205 = vpop.xlane.xlu0 %1204
        %v1206 = vsel %vm890, %v1202, 0.0
        %1207 = vadd.xlane.f32.xlu0 %v1206
        %v1208 = vpop.xlane.xlu0 %1207
        %v1209 = vrcp.pop %v1205
        %v1210 = vrcp.pop %v1208
        %v1211 = vmul.f32 %v1200, %v1209
        %v1212 = vmul.f32 %v1202, %v1210
        %v1213 = vpack.c.bf16 %v1211, %v1211
        %v1214 = vpack.c.bf16 %v1212, %v1212
        %1215 = vrot.lane.b32.xlu0 %v887, 48
        %v1216 = vpop.permute.xlu0 %1215
        %v1218 = vsel %vm890, %v1213, 0
        %v1221 = vsel %vm967, %v1216, 0
        %1223 = vmatpush.bf16.msra.mxu0 0
        %1224 = vmatpush.bf16.msra.mxu0 0
        %1225 = vmatpush.bf16.msra.mxu0 0
        %1226 = vmatpush.bf16.msra.mxu0 0
        %1227 = vmatpush.bf16.msra.mxu0 0
        %1228 = vmatpush.bf16.msra.mxu0 0
        %1229 = vmatpush.bf16.msra.mxu0 0
        %1230 = vmatpush.bf16.msra.mxu0 %v1221
        %1231 = vmatmul.bf16.gmra.mxu0 %v1218
        %v1232 = vpop.f32.mrf.mxu0
        %v1233 = vadd.f32 0.0, %v1232
        %v1234 = vpop.f32.mrf.mxu0
        %1235 = vdwg.mxu0
        %1236 = vrot.lane.b32.xlu0 %v912, 48
        %v1237 = vpop.permute.xlu0 %1236
        %v1239 = vsel %vm890, %v1214, 0
        %v1242 = vsel %vm967, %v1237, 0
        %1244 = vmatpush.bf16.msra.mxu0 0
        %1245 = vmatpush.bf16.msra.mxu0 0
        %1246 = vmatpush.bf16.msra.mxu0 0
        %1247 = vmatpush.bf16.msra.mxu0 0
        %1248 = vmatpush.bf16.msra.mxu0 0
        %1249 = vmatpush.bf16.msra.mxu0 0
        %1250 = vmatpush.bf16.msra.mxu0 0
        %1251 = vmatpush.bf16.msra.mxu0 %v1242
        %1252 = vmatmul.bf16.gmra.mxu0 %v1239
        %v1253 = vpop.f32.mrf.mxu0
        %v1254 = vadd.f32 0.0, %v1253
        %v1255 = vpop.f32.mrf.mxu0
        %1256 = vdwg.mxu0
        %v1257 = vpack.c.bf16 %v1233, %v1233
        %v1258 = vpack.c.bf16 %v1254, %v1254
        %1261 = vrot.lane.b32.xlu0 %v1257, 16
        %v1262 = vpop.permute.xlu0 %1261
        %1263 = vrot.lane.b32.xlu0 %v1258, 16
        %v1264 = vpop.permute.xlu0 %1263
        %vm1267 = vcmask 191616
        %1268 = vst.msk [vmem:[#allocation3] sm:$0xf] %vm1267, %v1262
        %1269 = vst.msk [vmem:[#allocation3 + $0x4] sm:$0xf] %vm1267, %v1264
        %1270 = vrot.lane.b32.xlu0 %v1012, 104
        %v1271 = vpop.permute.xlu0 %1270
        %1272 = vrot.lane.b32.xlu0 %v887, 72
        %v1273 = vpop.permute.xlu0 %1272
        %v1275 = vsel %vm890, %v1271, 0
        %v1278 = vsel %vm890, %v1273, 0
        %1280 = vmatpush.bf16.xpose.msra.mxu0 0
        %1281 = vmatpush.bf16.xpose.msra.mxu0 0
        %1282 = vmatpush.bf16.xpose.msra.mxu0 0
        %1283 = vmatpush.bf16.xpose.msra.mxu0 0
        %1284 = vmatpush.bf16.xpose.msra.mxu0 0
        %1285 = vmatpush.bf16.xpose.msra.mxu0 0
        %1286 = vmatpush.bf16.xpose.msra.mxu0 0
        %1287 = vmatpush.bf16.xpose.msra.mxu0 %v1278
        %1288 = vmatmul.bf16.gmra.mxu0 %v1275
        %v1289 = vpop.f32.mrf.mxu0
        %v1290 = vadd.f32 0.0, %v1289
        %v1291 = vpop.f32.mrf.mxu0
        %1292 = vdwg.mxu0
        %1293 = vrot.lane.b32.xlu0 %v1038, 104
        %v1294 = vpop.permute.xlu0 %1293
        %1295 = vrot.lane.b32.xlu0 %v912, 72
        %v1296 = vpop.permute.xlu0 %1295
        %v1298 = vsel %vm890, %v1294, 0
        %v1301 = vsel %vm890, %v1296, 0
        %1303 = vmatpush.bf16.xpose.msra.mxu0 0
        %1304 = vmatpush.bf16.xpose.msra.mxu0 0
        %1305 = vmatpush.bf16.xpose.msra.mxu0 0
        %1306 = vmatpush.bf16.xpose.msra.mxu0 0
        %1307 = vmatpush.bf16.xpose.msra.mxu0 0
        %1308 = vmatpush.bf16.xpose.msra.mxu0 0
        %1309 = vmatpush.bf16.xpose.msra.mxu0 0
        %1310 = vmatpush.bf16.xpose.msra.mxu0 %v1301
        %1311 = vmatmul.bf16.gmra.mxu0 %v1298
        %v1312 = vpop.f32.mrf.mxu0
        %v1313 = vadd.f32 0.0, %v1312
        %v1314 = vpop.f32.mrf.mxu0
        %1315 = vdwg.mxu0
        %v1316 = vsel %vm935, %v1290, -1e+30
        %v1317 = vsel %vm935, %v1313, -1e+30
        %v1318 = vsel %vm890, %v1316, -inf
        %1319 = vmax.xlane.f32.xlu0 %v1318
        %v1320 = vpop.xlane.xlu0 %1319
        %v1321 = vsel %vm890, %v1317, -inf
        %1322 = vmax.xlane.f32.xlu0 %v1321
        %v1323 = vpop.xlane.xlu0 %1322
        %v1324 = vsub.f32 %v1316, %v1320
        %v1325 = vsub.f32 %v1317, %v1323
        %v1326 = vmul.f32 %v1324, 1.442695
        %v1327 = vpow.pop %v1326
        %v1328 = vmul.f32 %v1325, 1.442695
        %v1329 = vpow.pop %v1328
        %v1330 = vsel %vm890, %v1327, 0.0
        %1331 = vadd.xlane.f32.xlu0 %v1330
        %v1332 = vpop.xlane.xlu0 %1331
        %v1333 = vsel %vm890, %v1329, 0.0
        %1334 = vadd.xlane.f32.xlu0 %v1333
        %v1335 = vpop.xlane.xlu0 %1334
        %v1336 = vrcp.pop %v1332
        %v1337 = vrcp.pop %v1335
        %v1338 = vmul.f32 %v1327, %v1336
        %v1339 = vmul.f32 %v1329, %v1337
        %v1340 = vpack.c.bf16 %v1338, %v1338
        %v1341 = vpack.c.bf16 %v1339, %v1339
        %1342 = vrot.lane.b32.xlu0 %v887, 40
        %v1343 = vpop.permute.xlu0 %1342
        %v1345 = vsel %vm890, %v1340, 0
        %v1348 = vsel %vm967, %v1343, 0
        %1350 = vmatpush.bf16.msra.mxu0 0
        %1351 = vmatpush.bf16.msra.mxu0 0
        %1352 = vmatpush.bf16.msra.mxu0 0
        %1353 = vmatpush.bf16.msra.mxu0 0
        %1354 = vmatpush.bf16.msra.mxu0 0
        %1355 = vmatpush.bf16.msra.mxu0 0
        %1356 = vmatpush.bf16.msra.mxu0 0
        %1357 = vmatpush.bf16.msra.mxu0 %v1348
        %1358 = vmatmul.bf16.gmra.mxu0 %v1345
        %v1359 = vpop.f32.mrf.mxu0
        %v1360 = vadd.f32 0.0, %v1359
        %v1361 = vpop.f32.mrf.mxu0
        %1362 = vdwg.mxu0
        %1363 = vrot.lane.b32.xlu0 %v912, 40
        %v1364 = vpop.permute.xlu0 %1363
        %v1366 = vsel %vm890, %v1341, 0
        %v1369 = vsel %vm967, %v1364, 0
        %1371 = vmatpush.bf16.msra.mxu0 0
        %1372 = vmatpush.bf16.msra.mxu0 0
        %1373 = vmatpush.bf16.msra.mxu0 0
        %1374 = vmatpush.bf16.msra.mxu0 0
        %1375 = vmatpush.bf16.msra.mxu0 0
        %1376 = vmatpush.bf16.msra.mxu0 0
        %1377 = vmatpush.bf16.msra.mxu0 0
        %1378 = vmatpush.bf16.msra.mxu0 %v1369
        %1379 = vmatmul.bf16.gmra.mxu0 %v1366
        %v1380 = vpop.f32.mrf.mxu0
        %v1381 = vadd.f32 0.0, %v1380
        %v1382 = vpop.f32.mrf.mxu0
        %1383 = vdwg.mxu0
        %v1384 = vpack.c.bf16 %v1360, %v1360
        %v1385 = vpack.c.bf16 %v1381, %v1381
        %1388 = vrot.lane.b32.xlu0 %v1384, 24
        %v1389 = vpop.permute.xlu0 %1388
        %1390 = vrot.lane.b32.xlu0 %v1385, 24
        %v1391 = vpop.permute.xlu0 %1390
        %vm1394 = vcmask 257216
        %1395 = vst.msk [vmem:[#allocation3] sm:$0xf] %vm1394, %v1389
        %1396 = vst.msk [vmem:[#allocation3 + $0x4] sm:$0xf] %vm1394, %v1391
        %v1397 = vld [vmem:[#allocation3] sm:$0xf]
        %v1398 = vld [vmem:[#allocation3 + $0x4] sm:$0xf]
        %v1399 = vld [vmem:[%s729] sm:$0xf]
        %v1400 = vld [vmem:[%s729 + $0x4] sm:$0xf]
        %v1401 = vld [vmem:[%s729 + $0x8] sm:$0xf]
        %v1402 = vld [vmem:[%s729 + $0xc] sm:$0xf]
        %v1403 = vld [vmem:[%s732] sm:$0x1]
        %v1405 = vperm.slane %v1403, 0
        %v1409 = vunpack.c.l.b16 %v1397
        %v1410 = vunpack.c.l.b16 %v1398
        %v1411 = vpack.c.b16 %v1410, %v1409
        %v1416 = vunpack.c.l.b16 %v1399
        %v1417 = vunpack.c.l.b16 %v1400
        %v1418 = vunpack.c.l.b16 %v1401
        %v1419 = vunpack.c.l.b16 %v1402
        %v1420 = vpack.c.b16 %v1417, %v1416
        %v1421 = vpack.c.b16 %v1419, %v1418
        %v1425 = vsel %vm774, %v1411, 0
        %1427 = vmatpush.bf16.msra.mxu0 0
        %1428 = vmatpush.bf16.msra.mxu0 0
        %1429 = vmatpush.bf16.msra.mxu0 0
        %1430 = vmatpush.bf16.msra.mxu0 0
        %1431 = vmatpush.bf16.msra.mxu0 0
        %1432 = vmatpush.bf16.msra.mxu0 0
        %1433 = vmatpush.bf16.msra.mxu0 %v1421
        %1434 = vmatpush.bf16.msra.mxu0 %v1420
        %1435 = vmatmul.bf16.gmra.mxu0 %v1425
        %v1436 = vpop.f32.mrf.mxu0
        %v1437 = vadd.f32 %v1405, %v1436
        %v1438 = vpop.f32.mrf.mxu0
        %v1439 = vadd.f32 %v1405, %v1438
        %1440 = vdwg.mxu0
        %v1441 = vadd.f32 %v770, %v1437
        %v1442 = vadd.f32 %v771, %v1439
        %v1443 = vld [vmem:[%s735] sm:$0x1]
        %v1444 = vld [vmem:[%s738] sm:$0x1]
        %v1445 = vsel %vm774, %v1441, 0.0
        %1446 = vadd.xlane.f32.xlu0 %v1445
        %v1447 = vpop.xlane.xlu0 %1446
        %v1448 = vsel %vm774, %v1442, 0.0
        %1449 = vadd.xlane.f32.xlu0 %v1448
        %v1450 = vpop.xlane.xlu0 %1449
        %v1451 = vmul.f32 %v1447, %v787
        %v1452 = vmul.f32 %v1450, %v787
        %v1453 = vsub.f32 %v1441, %v1451
        %v1454 = vsub.f32 %v1442, %v1452
        %v1455 = vmul.f32 %v1453, %v1453
        %v1456 = vmul.f32 %v1454, %v1454
        %v1457 = vsel %vm774, %v1455, 0.0
        %1458 = vadd.xlane.f32.xlu0 %v1457
        %v1459 = vpop.xlane.xlu0 %1458
        %v1460 = vsel %vm774, %v1456, 0.0
        %1461 = vadd.xlane.f32.xlu0 %v1460
        %v1462 = vpop.xlane.xlu0 %1461
        %v1463 = vmul.f32 %v1459, %v787
        %v1464 = vmul.f32 %v1462, %v787
        %v1465 = vadd.f32 %v1463, 1e-05
        %v1466 = vadd.f32 %v1464, 1e-05
        %v1467 = vrsqrt.pop %v1465
        %v1468 = vmul.f32 %v1467, %v1465
        %v1469 = vmul.f32 %v1468, %v1467
        %v1470 = vmul.f32 0.5, %v1469
        %v1471 = vsub.f32 1.5, %v1470
        %v1472 = vmul.f32 %v1467, %v1471
        %vm1473 = vweird.f32 %v1465
        %vm1474 = vweird.f32 %v1467
        %vm1475 = vmor %vm1473, %vm1474
        %v1476 = vsel %vm1475, %v1467, %v1472
        %v1477 = vrsqrt.pop %v1466
        %v1478 = vmul.f32 %v1477, %v1466
        %v1479 = vmul.f32 %v1478, %v1477
        %v1480 = vmul.f32 0.5, %v1479
        %v1481 = vsub.f32 1.5, %v1480
        %v1482 = vmul.f32 %v1477, %v1481
        %vm1483 = vweird.f32 %v1466
        %vm1484 = vweird.f32 %v1477
        %vm1485 = vmor %vm1483, %vm1484
        %v1486 = vsel %vm1485, %v1477, %v1482
        %v1487 = vmul.f32 %v1453, %v1476
        %v1488 = vmul.f32 %v1454, %v1486
        %v1490 = vperm.slane %v1443, 0
        %v1492 = vmul.f32 %v1487, %v1490
        %v1493 = vmul.f32 %v1488, %v1490
        %v1495 = vperm.slane %v1444, 0
        %v1497 = vadd.f32 %v1492, %v1495
        %v1498 = vadd.f32 %v1493, %v1495
        %v1499 = vld [vmem:[%s743] sm:$0xf]
        %v1500 = vld [vmem:[%s743 + $0x4] sm:$0xf]
        %v1501 = vld [vmem:[%s743 + $0x8] sm:$0xf]
        %v1502 = vld [vmem:[%s743 + $0xc] sm:$0xf]
        %v1503 = vpack.c.bf16 %v1498, %v1497
        %v1504 = vld [vmem:[%s746] sm:$0x1]
        %v1506 = vperm.slane %v1504, 0
        %v1512 = vunpack.c.l.b16 %v1499
        %v1513 = vunpack.c.l.b16 %v1500
        %v1514 = vunpack.c.l.b16 %v1501
        %v1515 = vunpack.c.l.b16 %v1502
        %v1516 = vpack.c.b16 %v1513, %v1512
        %v1517 = vpack.c.b16 %v1515, %v1514
        %v1521 = vsel %vm774, %v1503, 0
        %1523 = vmatpush.bf16.msra.mxu0 0
        %1524 = vmatpush.bf16.msra.mxu0 0
        %1525 = vmatpush.bf16.msra.mxu0 0
        %1526 = vmatpush.bf16.msra.mxu0 0
        %1527 = vmatpush.bf16.msra.mxu0 0
        %1528 = vmatpush.bf16.msra.mxu0 0
        %1529 = vmatpush.bf16.msra.mxu0 %v1517
        %1530 = vmatpush.bf16.msra.mxu0 %v1516
        %1531 = vmatmul.bf16.gmra.mxu0 %v1521
        %v1532 = vpop.f32.mrf.mxu0
        %v1533 = vadd.f32 %v1506, %v1532
        %v1534 = vpop.f32.mrf.mxu0
        %v1535 = vadd.f32 %v1506, %v1534
        %1536 = vdwg.mxu0
        %v1537 = vpack.c.bf16 %v1533, %v1533
        %v1538 = vpack.c.bf16 %v1535, %v1535
        %v1539 = vunpack.c.l.bf16 %v1537
        %v1540 = vunpack.c.l.bf16 %v1538
        %v1541 = vmul.f32 %v1539, 1.703125
        %v1542 = vmul.f32 %v1540, 1.703125
        %v1543 = vpack.c.bf16 %v1541, %v1541
        %v1544 = vpack.c.bf16 %v1542, %v1542
        %v1545 = vxor.u32 %v1543, 2147516416
        %v1546 = vxor.u32 %v1544, 2147516416
        %v1547 = vunpack.c.l.bf16 %v1545
        %v1548 = vunpack.c.l.bf16 %v1546
        %v1549 = vmul.f32 %v1547, 1.442695
        %v1550 = vpow.pop %v1549
        %v1551 = vmul.f32 %v1548, 1.442695
        %v1552 = vpow.pop %v1551
        %v1553 = vpack.c.bf16 %v1550, %v1550
        %v1554 = vpack.c.bf16 %v1552, %v1552
        %v1555 = vunpack.c.l.bf16 %v1553
        %v1556 = vunpack.c.l.bf16 %v1554
        %v1557 = vadd.f32 %v1555, 1.0
        %v1558 = vadd.f32 %v1556, 1.0
        %v1559 = vpack.c.bf16 %v1557, %v1557
        %v1560 = vpack.c.bf16 %v1558, %v1558
        %v1561 = vunpack.c.h.bf16 1065369472
        %v1562 = vunpack.c.l.bf16 1065369472
        %v1563 = vunpack.c.h.bf16 %v1559
        %v1564 = vunpack.c.l.bf16 %v1559
        %v1565 = vrcp.pop %v1563
        %v1566 = vmul.f32 %v1561, %v1565
        %v1567 = vrcp.pop %v1564
        %v1568 = vmul.f32 %v1562, %v1567
        %v1569 = vpack.c.bf16 %v1566, %v1568
        %v1570 = vunpack.c.h.bf16 %v1560
        %v1571 = vunpack.c.l.bf16 %v1560
        %v1572 = vrcp.pop %v1570
        %v1573 = vmul.f32 %v1561, %v1572
        %v1574 = vrcp.pop %v1571
        %v1575 = vmul.f32 %v1562, %v1574
        %v1576 = vpack.c.bf16 %v1573, %v1575
        %v1577 = vunpack.c.l.bf16 %v1569
        %v1578 = vunpack.c.l.bf16 %v1576
        %v1579 = vmul.f32 %v1539, %v1577
        %v1580 = vmul.f32 %v1540, %v1578
        %v1581 = vpack.c.bf16 %v1580, %v1579
        %v1582 = vld [vmem:[%s751] sm:$0xf]
        %v1583 = vld [vmem:[%s751 + $0x4] sm:$0xf]
        %v1584 = vld [vmem:[%s751 + $0x8] sm:$0xf]
        %v1585 = vld [vmem:[%s751 + $0xc] sm:$0xf]
        %v1586 = vld [vmem:[%s751 + $0x10] sm:$0xf]
        %v1587 = vld [vmem:[%s751 + $0x14] sm:$0xf]
        %v1588 = vld [vmem:[%s751 + $0x18] sm:$0xf]
        %v1589 = vld [vmem:[%s751 + $0x1c] sm:$0xf]
        %v1590 = vld [vmem:[%s751 + $0x20] sm:$0xf]
        %v1591 = vld [vmem:[%s751 + $0x24] sm:$0xf]
        %v1592 = vld [vmem:[%s751 + $0x28] sm:$0xf]
        %v1593 = vld [vmem:[%s751 + $0x2c] sm:$0xf]
        %v1594 = vld [vmem:[%s751 + $0x30] sm:$0xf]
        %v1595 = vld [vmem:[%s751 + $0x34] sm:$0xf]
        %v1596 = vld [vmem:[%s751 + $0x38] sm:$0xf]
        %v1597 = vld [vmem:[%s751 + $0x3c] sm:$0xf]
        %v1598 = vld [vmem:[%s754] sm:$0x1]
        %v1600 = vperm.slane %v1598, 0
        %v1618 = vunpack.c.l.b16 %v1582
        %v1619 = vunpack.c.l.b16 %v1583
        %v1620 = vunpack.c.l.b16 %v1584
        %v1621 = vunpack.c.l.b16 %v1585
        %v1622 = vunpack.c.l.b16 %v1586
        %v1623 = vunpack.c.l.b16 %v1587
        %v1624 = vunpack.c.l.b16 %v1588
        %v1625 = vunpack.c.l.b16 %v1589
        %v1626 = vunpack.c.l.b16 %v1590
        %v1627 = vunpack.c.l.b16 %v1591
        %v1628 = vunpack.c.l.b16 %v1592
        %v1629 = vunpack.c.l.b16 %v1593
        %v1630 = vunpack.c.l.b16 %v1594
        %v1631 = vunpack.c.l.b16 %v1595
        %v1632 = vunpack.c.l.b16 %v1596
        %v1633 = vunpack.c.l.b16 %v1597
        %v1634 = vpack.c.b16 %v1619, %v1618
        %v1635 = vpack.c.b16 %v1621, %v1620
        %v1636 = vpack.c.b16 %v1623, %v1622
        %v1637 = vpack.c.b16 %v1625, %v1624
        %v1638 = vpack.c.b16 %v1627, %v1626
        %v1639 = vpack.c.b16 %v1629, %v1628
        %v1640 = vpack.c.b16 %v1631, %v1630
        %v1641 = vpack.c.b16 %v1633, %v1632
        %1650 = vmatpush.bf16.msra.mxu0 %v1641
        %1651 = vmatpush.bf16.msra.mxu0 %v1640
        %1652 = vmatpush.bf16.msra.mxu0 %v1639
        %1653 = vmatpush.bf16.msra.mxu0 %v1638
        %1654 = vmatpush.bf16.msra.mxu0 %v1637
        %1655 = vmatpush.bf16.msra.mxu0 %v1636
        %1656 = vmatpush.bf16.msra.mxu0 %v1635
        %1657 = vmatpush.bf16.msra.mxu0 %v1634
        %1658 = vmatmul.bf16.gmra.mxu0 %v1581
        %v1659 = vpop.f32.mrf.mxu0
        %v1660 = vadd.f32 %v1600, %v1659
        %v1661 = vpop.f32.mrf.mxu0
        %v1662 = vadd.f32 %v1600, %v1661
        %1663 = vdwg.mxu0
        %v1664 = vadd.f32 %v1441, %v1660
        %v1665 = vadd.f32 %v1442, %v1662
        %1666 = vst.msk [vmem:[#allocation2] sm:$0xff] %vm774, %v1664
        %1667 = vst.msk [vmem:[#allocation2 + $0x8] sm:$0xff] %vm774, %v1665
        %p1668 = scmp.eq.s32.totalorder %s43, 1
        // Predicated region
        $region93: #{tpu_custom_call.1} parent=87 // pred_check
          %p1669 = pneg %p1668
        $region94: #{tpu_custom_call.1} parent=87 // pred_check_branch
          %1671 = sbr.rel (%p1669) target = $region96
        $region95: #{tpu_custom_call.1} parent=87 // pred_region
          %s1672 = sld [smem:[#allocation6 + %s757]]
          %s1673 = scalar_lea.vmem [#allocation2], %s1672
          %v1674 = vld [vmem:[%s1673] sm:$0x1]
          %vm1675 = vcmask 253952
          %1676 = vst.msk [vmem:[#allocation4] sm:$0x1] %vm1675, %v1674
          %s1677 = sadd.s32 %s757, 1
          %s1678 = sld [smem:[#allocation6 + %s1677]]
          %s1679 = sadd.s32 %s1678, 8
          %s1680 = scalar_lea.vmem [#allocation2], %s1679
          %v1681 = vld [vmem:[%s1680] sm:$0x1]
          %1682 = vst.msk [vmem:[#allocation4 + $0x1] sm:$0x1] %vm1675, %v1681
          %v1683 = vld [vmem:[#allocation4] sm:$0x3]
          %v1684 = vld [vmem:[%s15] sm:$0x1]
          %v1685 = vld [vmem:[%s16] sm:$0x1]
          %vm1686 = vcmask 254976
          %v1687 = vsel %vm1686, %v1683, 0.0
          %1688 = vadd.xlane.f32.xlu0 %v1687
          %v1689 = vpop.xlane.xlu0 %1688
          %v1690 = vmul.f32 %v1689, %v787
          %v1691 = vsub.f32 %v1683, %v1690
          %v1692 = vmul.f32 %v1691, %v1691
          %v1693 = vsel %vm1686, %v1692, 0.0
          %1694 = vadd.xlane.f32.xlu0 %v1693
          %v1695 = vpop.xlane.xlu0 %1694
          %v1696 = vmul.f32 %v1695, %v787
          %v1697 = vadd.f32 %v1696, 1e-05
          %v1698 = vrsqrt.pop %v1697
          %v1699 = vmul.f32 %v1698, %v1697
          %v1700 = vmul.f32 %v1699, %v1698
          %v1701 = vmul.f32 0.5, %v1700
          %v1702 = vsub.f32 1.5, %v1701
          %v1703 = vmul.f32 %v1698, %v1702
          %vm1704 = vweird.f32 %v1697
          %vm1705 = vweird.f32 %v1698
          %vm1706 = vmor %vm1704, %vm1705
          %v1707 = vsel %vm1706, %v1698, %v1703
          %v1708 = vmul.f32 %v1691, %v1707
          %v1710 = vperm.slane %v1684, 0
          %v1712 = vmul.f32 %v1708, %v1710
          %v1714 = vperm.slane %v1685, 0
          %v1716 = vadd.f32 %v1712, %v1714
          %v1717 = vld [vmem:[%s17] sm:$0xf]
          %v1718 = vld [vmem:[%s17 + $0x4] sm:$0xf]
          %v1719 = vld [vmem:[%s17 + $0x8] sm:$0xf]
          %v1720 = vld [vmem:[%s17 + $0xc] sm:$0xf]
          %v1721 = vpack.c.bf16 %v1716, %v1716
          %v1726 = vunpack.c.l.b16 %v1717
          %v1727 = vunpack.c.l.b16 %v1718
          %v1728 = vunpack.c.l.b16 %v1719
          %v1729 = vunpack.c.l.b16 %v1720
          %v1730 = vpack.c.b16 %v1727, %v1726
          %v1731 = vpack.c.b16 %v1729, %v1728
          %v1735 = vsel %vm774, %v1721, 0
          %1737 = vmatpush.bf16.msra.mxu0 0
          %1738 = vmatpush.bf16.msra.mxu0 0
          %1739 = vmatpush.bf16.msra.mxu0 0
          %1740 = vmatpush.bf16.msra.mxu0 0
          %1741 = vmatpush.bf16.msra.mxu0 0
          %1742 = vmatpush.bf16.msra.mxu0 0
          %1743 = vmatpush.bf16.msra.mxu0 %v1731
          %1744 = vmatpush.bf16.msra.mxu0 %v1730
          %1745 = vmatmul.bf16.gmra.mxu0 %v1735
          %v1746 = vpop.f32.mrf.mxu0
          %v1747 = vadd.f32 0.0, %v1746
          %v1748 = vpop.f32.mrf.mxu0
          %1749 = vdwg.mxu0
          %1750 = vst.msk [vmem:[#allocation7] sm:$0x3] %vm1686, %v1747
        $region96: #{tpu_custom_call.1} parent=87 // pred_fallthru
          _
        // Predicated region
        $region97: #{tpu_custom_call.1} parent=87 // pred_check
          %p1751 = pneg %p490
        $region98: #{tpu_custom_call.1} parent=87 // pred_check_branch
          %1753 = sbr.rel (%p1751) target = $region100
        $region99: #{tpu_custom_call.1} parent=87 // pred_region
          %1755 = vsyncadd [#allocation8], 0
          %s1756 = smul.addr %s42, 2
          %s1757 = scalar_lea.hbm %s18, %s1756
          %s1759 = sshll.u32 [#allocation7], 4
          %s1760 = int_to_ptr.vmem [resolvable:$true] %s1759
          %s1761 = sshll.u32 %s1757, 4
          %s1762 = int_to_ptr.hbm [resolvable:$true] %s1761
          %1764 = dma.vmem_to_hbm [thread:$0]  %s1760, 32, %s1762, [#allocation8]
        $region100: #{tpu_custom_call.1} parent=87 // pred_fallthru
          _
        // Predicated region
        $region101: #{tpu_custom_call.1} parent=87 // pred_check
          %p1765 = pneg %p490
        $region102: #{tpu_custom_call.1} parent=87 // pred_check_branch
          %1767 = sbr.rel (%p1765) target = $region104
        $region103: #{tpu_custom_call.1} parent=87 // pred_region
          %1769 = dma.done [#allocation8], 32
        $region104: #{tpu_custom_call.1} parent=87 // pred_fallthru
          _
      $region88: #{tpu_custom_call.1} parent=5 // pred_fallthru
        _
      %p1770 = scmp.le.s32.totalorder 2, %s33
      // Predicated region
      $region105: #{tpu_custom_call.1} parent=5 // pred_check
        %p1771 = pneg %p1770
      $region106: #{tpu_custom_call.1} parent=5 // pred_check_branch
        %1773 = sbr.rel (%p1771) target = $region108
      $region107: #{tpu_custom_call.1} parent=5 // pred_region
        %s1774 = ssub.s32 %s33, 2
      $region108: #{tpu_custom_call.1} parent=5 // pred_fallthru
        _
    $region6: #{tpu_custom_call.1} parent=1 // loop_footer
      %s37 = sadd.s32 1, %s33
    $region7: #{tpu_custom_call.1} parent=1 // loop_footer_branch
      %32 = sbr.rel target = $region3
    $region8: #{tpu_custom_call.1} parent=1 // loop_exit
      _
    %1775 = vsyncpa [#allocation8], 1
    %s1776 = scalar_lea.sflag [#allocation8], 1
    %1777 = vsyncpa %s1776, 1

</llo_original>
